<compile_context>
chip_gen: v6e
topology: v6e:2x2x1
jax: 0.10.0
libtpu: 0.0.40
codegen_flags: <defaults>
</compile_context>

<pallas_src>
import jax
import jax.numpy as jnp
from jax import lax
from jax.experimental import pallas as pl
from jax.experimental.pallas import tpu as pltpu


def _attention_kernel(enc_ref, dh_ref, weT_ref, wdT_ref, wf_ref, b_ref,
                      awe_ref, alpha_ref):
    # enc_ref: (TB, N, E)  dh_ref: (TB, D)        -- streaming (bf16/f32) dtype
    # weT_ref: (E, A)      wdT_ref: (D, A)        -- streaming dtype
    # wf_ref:  (1, A)      b_ref:  (1, A) f32     (b = encoder_att.bias + decoder_att.bias)
    # awe_ref: (TB, E)     alpha_ref: (TB, N)     -- f32 outputs
    enc = enc_ref[...]                                            # (TB, N, E)

    # att1 = encoder_att(encoder_out): contract E directly on the 3-D tile,
    # f32 accumulation on the MXU; no in-kernel reshapes (not views -> copies).
    att1 = lax.dot_general(enc, weT_ref[...],
                           dimension_numbers=(((2,), (0,)), ((), ())),
                           preferred_element_type=jnp.float32)    # (TB, N, A)
    # att2 = decoder_att(decoder_hidden): one (TB, D) @ (D, A) matmul.
    att2 = jnp.dot(dh_ref[...], wdT_ref[...],
                   preferred_element_type=jnp.float32)            # (TB, A)

    h = jnp.maximum(att1 + att2[:, None, :] + b_ref[...], 0.0)    # (TB, N, A) f32

    # full_att (Linear(A -> 1)) as a VPU mul + lane reduce over A; scores stay
    # lane-dense as (TB, N). full_att.bias is a constant shift across N and
    # cancels in the softmax, so it is omitted (mathematically identical).
    att = jnp.sum(h * wf_ref[...], axis=-1)                       # (TB, N) f32

    # Softmax over the pixel axis N, exact normalization (see FIX note above).
    att = att - jnp.max(att, axis=-1, keepdims=True)
    e = jnp.exp(att)
    alpha = e / jnp.sum(e, axis=-1, keepdims=True)                # (TB, N) f32

    # attention_weighted_encoding: VPU weighted reduce over N (bf16 * f32 -> f32).
    awe = jnp.sum(enc * alpha[:, :, None], axis=1)                # (TB, E) f32

    awe_ref[...] = awe.astype(awe_ref.dtype)
    alpha_ref[...] = alpha.astype(alpha_ref.dtype)


def _pick_tb(B, N, E, D, A, *, enc_itemsize=2, budget_bytes=48 * 1024 * 1024):
    """Largest batch tile whose full per-step VMEM footprint fits the budget.

    Counts the double-buffered enc stream, the f32 (tb,N,A) att1/h intermediates,
    the f32 weighted-reduce product, per-row outputs, and the single-buffered
    weights. Prefers tiles giving an even grid of >= 4 steps (v7x megacore)."""
    # Constant (single-buffered) operands.
    fixed = (E * A + D * A) * enc_itemsize + 2 * A * 4
    # Per batch row, per grid step.
    per_row = (2 * N * E * enc_itemsize       # encoder_out tile, double-buffered
               + 2 * N * A * 4                # f32 att1 + relu'd h intermediates
               + N * E * 4                    # f32 alpha*enc product for the reduce
               + (E + 2 * N + A) * 4)         # awe / alpha / score rows (f32)
    cap = max(1, (budget_bytes - fixed) // per_row)

    divisors = [d for d in range(8, B + 1, 8) if B % d == 0]
    if not divisors:
        return B                              # tiny batch: one whole-batch tile
    fitting = [d for d in divisors if d <= cap]
    if not fitting:
        return divisors[0]                    # nothing fits: smallest (least VMEM) tile
    # Prefer grids that shard evenly across 2 TensorCores with >= 2 steps each.
    megacore_friendly = [d for d in fitting if (B // d) % 2 == 0 and (B // d) >= 4]
    pool = megacore_friendly if megacore_friendly else fitting
    return max(pool)


def attention_forward(encoder_out, decoder_hidden, params, *, tb=None,
                      compute_dtype=jnp.bfloat16,
                      vmem_budget_bytes=48 * 1024 * 1024,
                      vmem_limit_bytes=64 * 1024 * 1024):
    """encoder_out: (B, N, E); decoder_hidden: (B, D) -> (awe (B,E), alpha (B,N))."""
    B, N, E = encoder_out.shape
    D = decoder_hidden.shape[1]
    A = params["we"].shape[0]

    cdt = jnp.dtype(compute_dtype)
    # Stream the big operands in the compute dtype (bf16 by default); all
    # accumulation inside the kernel remains f32.
    enc = encoder_out.astype(cdt)
    dh = decoder_hidden.astype(cdt)
    weT = params["we"].T.astype(cdt)                       # (E, A)
    wdT = params["wd"].T.astype(cdt)                       # (D, A)
    wf_row = params["wf"].reshape(1, A).astype(jnp.float32)
    bias = (params["be"] + params["bd"]).reshape(1, A).astype(jnp.float32)
    # NOTE: params["bf"] is intentionally unused -- softmax is shift-invariant.

    if tb is None:
        tb = _pick_tb(B, N, E, D, A, enc_itemsize=cdt.itemsize,
                      budget_bytes=vmem_budget_bytes)
    assert B % tb == 0, "batch tile must divide the batch"

    out_shape = (
        jax.ShapeDtypeStruct((B, E), encoder_out.dtype),   # attention-weighted encoding
        jax.ShapeDtypeStruct((B, N), jnp.float32),         # alpha kept f32 (loss term)
    )

    def build(single_buffer_consts):
        const_kw = ({"pipeline_mode": pl.Buffered(1)} if single_buffer_consts else {})
        grid_spec = pltpu.PrefetchScalarGridSpec(
            num_scalar_prefetch=0,
            grid=(B // tb,),
            in_specs=[
                pl.BlockSpec((tb, N, E), lambda b: (b, 0, 0)),        # encoder_out tile
                pl.BlockSpec((tb, D), lambda b: (b, 0)),              # decoder_hidden tile
                pl.BlockSpec((E, A), lambda b: (0, 0), **const_kw),   # encoder_att.weight^T
                pl.BlockSpec((D, A), lambda b: (0, 0), **const_kw),   # decoder_att.weight^T
                pl.BlockSpec((1, A), lambda b: (0, 0), **const_kw),   # full_att.weight row
                pl.BlockSpec((1, A), lambda b: (0, 0), **const_kw),   # folded bias
            ],
            out_specs=[
                pl.BlockSpec((tb, E), lambda b: (b, 0)),              # weighted encoding
                pl.BlockSpec((tb, N), lambda b: (b, 0)),              # alpha
            ],
        )
        return pl.pallas_call(
            _attention_kernel,
            out_shape=out_shape,
            grid_spec=grid_spec,
            compiler_params=pltpu.CompilerParams(
                dimension_semantics=("parallel",),
                vmem_limit_bytes=vmem_limit_bytes,
            ),
        )

    try:
        awe, alpha = build(True)(enc, dh, weT, wdT, wf_row, bias)
    except Exception:
        # Graceful fallback if pipeline_mode=pl.Buffered(1) is unsupported in
        # this jax version / interpret mode: identical kernel, default buffering.
        awe, alpha = build(False)(enc, dh, weT, wdT, wf_row, bias)
    return awe, alpha


def _reference(encoder_out, decoder_hidden, params):
    """Pure-JAX reference mirroring the PyTorch forward."""
    att1 = encoder_out @ params["we"].T + params["be"]                 # (B, N, A)
    att2 = decoder_hidden @ params["wd"].T + params["bd"]              # (B, A)
    h = jnp.maximum(att1 + att2[:, None, :], 0.0)
    att = (h @ params["wf"].T + params["bf"])[..., 0]                  # (B, N)
    alpha = jax.nn.softmax(att, axis=1)
    awe = jnp.sum(encoder_out * alpha[..., None], axis=1)              # (B, E)
    return awe, alpha


if __name__ == "__main__":
    # Small test shapes: B=16, N(pixels)=8, E(encoder)=32, D(decoder)=32, A(attn)=16.
    # (Production shapes are N~196, E~2048, A~512; the tiling/VMEM logic above
    # is sized for those -- these toy sizes are just a correctness check.)
    B, N, E, D, A = 16, 8, 32, 32, 16

    key = jax.random.PRNGKey(0)
    ks = jax.random.split(key, 8)
    # PyTorch-Linear shaped params: weight (out, in), bias (out,)
    params = {
        "we": jax.random.normal(ks[0], (A, E), jnp.float32) * 0.1,
        "be": jax.random.normal(ks[1], (A,), jnp.float32) * 0.1,
        "wd": jax.random.normal(ks[2], (A, D), jnp.float32) * 0.1,
        "bd": jax.random.normal(ks[3], (A,), jnp.float32) * 0.1,
        "wf": jax.random.normal(ks[4], (1, A), jnp.float32) * 0.1,
        "bf": jax.random.normal(ks[5], (1,), jnp.float32) * 0.1,
    }
    encoder_out = jax.random.normal(ks[6], (B, N, E), jnp.float32)
    decoder_hidden = jax.random.normal(ks[7], (B, D), jnp.float32)

    awe_ref, alpha_ref = _reference(encoder_out, decoder_hidden, params)

    # f32 streaming path: tight tolerance (only op-ordering differences remain).
    awe32, alpha32 = attention_forward(encoder_out, decoder_hidden, params,
                                       compute_dtype=jnp.float32)
    jax.block_until_ready((awe32, alpha32))
    assert jnp.allclose(alpha32, alpha_ref, atol=2e-3, rtol=2e-3), "alpha mismatch (f32)"
    assert jnp.allclose(awe32, awe_ref, atol=2e-3, rtol=2e-3), "awe mismatch (f32)"

    # Default bf16-streaming path (f32 accumulation): bf16-appropriate tolerance.
    awe, alpha = attention_forward(encoder_out, decoder_hidden, params)
    jax.block_until_ready((awe, alpha))
    assert jnp.allclose(alpha, alpha_ref, atol=3e-2, rtol=3e-2), "alpha mismatch (bf16)"
    assert jnp.allclose(awe, awe_ref, atol=3e-2, rtol=3e-2), "awe mismatch (bf16)"

    print("KERNEL_OK")
</pallas_src>

<mosaic_0001>
module attributes {stable_mosaic.version = 11 : i64} {
  func.func @_attention_kernel(%arg0: i32, %arg1: memref<16x8x32xf32, #tpu.memory_space<vmem>>, %arg2: memref<16x32xf32, #tpu.memory_space<vmem>>, %arg3: memref<32x16xf32, #tpu.memory_space<vmem>>, %arg4: memref<32x16xf32, #tpu.memory_space<vmem>>, %arg5: memref<1x16xf32, #tpu.memory_space<vmem>>, %arg6: memref<1x16xf32, #tpu.memory_space<vmem>>, %arg7: memref<16x32xf32, #tpu.memory_space<vmem>>, %arg8: memref<16x8xf32, #tpu.memory_space<vmem>>) attributes {dimension_semantics = [#tpu.dimension_semantics<parallel>], iteration_bounds = array<i64: 1>, scalar_prefetch = 0 : i64, scratch_operands = 0 : i64, tpu.core_type = #tpu.core_type<tc>, window_params = [{transform_indices = @transform_0, window_bounds = array<i64: 16, 8, 32>}, {transform_indices = @transform_1, window_bounds = array<i64: 16, 32>}, {pipeline_mode = #tpu.pipeline_mode<synchronous>, transform_indices = @transform_2, window_bounds = array<i64: 32, 16>}, {pipeline_mode = #tpu.pipeline_mode<synchronous>, transform_indices = @transform_3, window_bounds = array<i64: 32, 16>}, {pipeline_mode = #tpu.pipeline_mode<synchronous>, transform_indices = @transform_4, window_bounds = array<i64: 1, 16>}, {pipeline_mode = #tpu.pipeline_mode<synchronous>, transform_indices = @transform_5, window_bounds = array<i64: 1, 16>}, {transform_indices = @transform_6, window_bounds = array<i64: 16, 32>}, {transform_indices = @transform_7, window_bounds = array<i64: 16, 8>}]} {
    %c0 = arith.constant 0 : index
    %c0_0 = arith.constant 0 : index
    %c0_1 = arith.constant 0 : index
    %0 = vector.load %arg1[%c0, %c0_0, %c0_1] : memref<16x8x32xf32, #tpu.memory_space<vmem>>, vector<16x8x32xf32>
    %c0_2 = arith.constant 0 : index
    %c0_3 = arith.constant 0 : index
    %1 = vector.load %arg3[%c0_2, %c0_3] : memref<32x16xf32, #tpu.memory_space<vmem>>, vector<32x16xf32>
    %cst = arith.constant dense<0.000000e+00> : vector<16x8x16xf32>
    %2 = tpu.matmul %0, %1, %cst {dimension_numbers = #tpu.dot_dimension_numbers<[2], [0], [0, 1], [1], [0, 0, 0, 1, 1, 1], [], []>} : vector<16x8x32xf32>, vector<32x16xf32>, vector<16x8x16xf32> -> vector<16x8x16xf32>
    %c0_4 = arith.constant 0 : index
    %c0_5 = arith.constant 0 : index
    %3 = vector.load %arg2[%c0_4, %c0_5] : memref<16x32xf32, #tpu.memory_space<vmem>>, vector<16x32xf32>
    %c0_6 = arith.constant 0 : index
    %c0_7 = arith.constant 0 : index
    %4 = vector.load %arg4[%c0_6, %c0_7] : memref<32x16xf32, #tpu.memory_space<vmem>>, vector<32x16xf32>
    %cst_8 = arith.constant dense<0.000000e+00> : vector<16x16xf32>
    %5 = tpu.matmul %3, %4, %cst_8 {dimension_numbers = #tpu.dot_dimension_numbers<[1], [0], [0], [1], [0, 0, 1, 1], [], []>} : vector<16x32xf32>, vector<32x16xf32>, vector<16x16xf32> -> vector<16x16xf32>
    %6 = vector.shape_cast %5 : vector<16x16xf32> to vector<16x1x16xf32>
    %7 = vector.broadcast %6 : vector<16x1x16xf32> to vector<16x8x16xf32>
    %8 = arith.addf %2, %7 : vector<16x8x16xf32>
    %c0_9 = arith.constant 0 : index
    %c0_10 = arith.constant 0 : index
    %9 = vector.load %arg6[%c0_9, %c0_10] : memref<1x16xf32, #tpu.memory_space<vmem>>, vector<1x16xf32>
    %10 = vector.shape_cast %9 : vector<1x16xf32> to vector<1x1x16xf32>
    %11 = vector.broadcast %10 : vector<1x1x16xf32> to vector<16x8x16xf32>
    %12 = arith.addf %8, %11 : vector<16x8x16xf32>
    %cst_11 = arith.constant 0.000000e+00 : f32
    %13 = vector.broadcast %cst_11 : f32 to vector<16x8x16xf32>
    %14 = arith.maximumf %12, %13 : vector<16x8x16xf32>
    %c0_12 = arith.constant 0 : index
    %c0_13 = arith.constant 0 : index
    %15 = vector.load %arg5[%c0_12, %c0_13] : memref<1x16xf32, #tpu.memory_space<vmem>>, vector<1x16xf32>
    %16 = vector.shape_cast %15 : vector<1x16xf32> to vector<1x1x16xf32>
    %17 = vector.broadcast %16 : vector<1x1x16xf32> to vector<16x8x16xf32>
    %18 = arith.mulf %14, %17 : vector<16x8x16xf32>
    %cst_14 = arith.constant dense<0.000000e+00> : vector<16x8xf32>
    %19 = vector.multi_reduction <add>, %18, %cst_14 [2] : vector<16x8x16xf32> to vector<16x8xf32>
    %cst_15 = arith.constant dense<0xFF800000> : vector<16xf32>
    %20 = vector.multi_reduction <maximumf>, %19, %cst_15 [1] : vector<16x8xf32> to vector<16xf32>
    %21 = vector.shape_cast %20 : vector<16xf32> to vector<16x1xf32>
    %22 = vector.broadcast %21 : vector<16x1xf32> to vector<16x8xf32>
    %23 = arith.subf %19, %22 : vector<16x8xf32>
    %24 = math.exp %23 : vector<16x8xf32>
    %cst_16 = arith.constant dense<0.000000e+00> : vector<16xf32>
    %25 = vector.multi_reduction <add>, %24, %cst_16 [1] : vector<16x8xf32> to vector<16xf32>
    %26 = vector.shape_cast %25 : vector<16xf32> to vector<16x1xf32>
    %27 = vector.broadcast %26 : vector<16x1xf32> to vector<16x8xf32>
    %28 = arith.divf %24, %27 : vector<16x8xf32>
    %29 = vector.shape_cast %28 : vector<16x8xf32> to vector<16x8x1xf32>
    %30 = vector.broadcast %29 : vector<16x8x1xf32> to vector<16x8x32xf32>
    %31 = arith.mulf %0, %30 : vector<16x8x32xf32>
    %cst_17 = arith.constant dense<0.000000e+00> : vector<16x32xf32>
    %32 = vector.multi_reduction <add>, %31, %cst_17 [1] : vector<16x8x32xf32> to vector<16x32xf32>
    %c0_18 = arith.constant 0 : index
    %c0_19 = arith.constant 0 : index
    %33 = vector.load %arg7[%c0_18, %c0_19] : memref<16x32xf32, #tpu.memory_space<vmem>>, vector<16x32xf32>
    tpu.vector_store %arg7[%c0_18, %c0_19], %32 {strides = array<i32>} : memref<16x32xf32, #tpu.memory_space<vmem>>, vector<16x32xf32>,
    %c0_20 = arith.constant 0 : index
    %c0_21 = arith.constant 0 : index
    %34 = vector.load %arg8[%c0_20, %c0_21] : memref<16x8xf32, #tpu.memory_space<vmem>>, vector<16x8xf32>
    tpu.vector_store %arg8[%c0_20, %c0_21], %28 {strides = array<i32>} : memref<16x8xf32, #tpu.memory_space<vmem>>, vector<16x8xf32>,
    return
  }
  func.func @transform_0(%arg0: i32) -> (i32, i32, i32) {
    %c0_i32 = arith.constant 0 : i32
    %c0_i32_0 = arith.constant 0 : i32
    %c0_i32_1 = arith.constant 0 : i32
    return %arg0, %c0_i32, %c0_i32_0 : i32, i32, i32
  }
  func.func @transform_1(%arg0: i32) -> (i32, i32) {
    %c0_i32 = arith.constant 0 : i32
    %c0_i32_0 = arith.constant 0 : i32
    return %arg0, %c0_i32 : i32, i32
  }
  func.func @transform_2(%arg0: i32) -> (i32, i32) {
    %c0_i32 = arith.constant 0 : i32
    %c0_i32_0 = arith.constant 0 : i32
    %c0_i32_1 = arith.constant 0 : i32
    return %c0_i32, %c0_i32_0 : i32, i32
  }
  func.func @transform_3(%arg0: i32) -> (i32, i32) {
    %c0_i32 = arith.constant 0 : i32
    %c0_i32_0 = arith.constant 0 : i32
    %c0_i32_1 = arith.constant 0 : i32
    return %c0_i32, %c0_i32_0 : i32, i32
  }
  func.func @transform_4(%arg0: i32) -> (i32, i32) {
    %c0_i32 = arith.constant 0 : i32
    %c0_i32_0 = arith.constant 0 : i32
    %c0_i32_1 = arith.constant 0 : i32
    return %c0_i32, %c0_i32_0 : i32, i32
  }
  func.func @transform_5(%arg0: i32) -> (i32, i32) {
    %c0_i32 = arith.constant 0 : i32
    %c0_i32_0 = arith.constant 0 : i32
    %c0_i32_1 = arith.constant 0 : i32
    return %c0_i32, %c0_i32_0 : i32, i32
  }
  func.func @transform_6(%arg0: i32) -> (i32, i32) {
    %c0_i32 = arith.constant 0 : i32
    %c0_i32_0 = arith.constant 0 : i32
    return %arg0, %c0_i32 : i32, i32
  }
  func.func @transform_7(%arg0: i32) -> (i32, i32) {
    %c0_i32 = arith.constant 0 : i32
    %c0_i32_0 = arith.constant 0 : i32
    return %arg0, %c0_i32 : i32, i32
  }
}

module attributes {stable_mosaic.version = 11 : i64} {
  func.func @_attention_kernel(%arg0: i32, %arg1: memref<16x8x32xf32, #tpu.memory_space<vmem>>, %arg2: memref<16x32xf32, #tpu.memory_space<vmem>>, %arg3: memref<32x16xf32, #tpu.memory_space<vmem>>, %arg4: memref<32x16xf32, #tpu.memory_space<vmem>>, %arg5: memref<1x16xf32, #tpu.memory_space<vmem>>, %arg6: memref<1x16xf32, #tpu.memory_space<vmem>>, %arg7: memref<16x32xf32, #tpu.memory_space<vmem>>, %arg8: memref<16x8xf32, #tpu.memory_space<vmem>>) attributes {dimension_semantics = [#tpu.dimension_semantics<parallel>], iteration_bounds = array<i64: 1>, scalar_prefetch = 0 : i64, scratch_operands = 0 : i64, tpu.core_type = #tpu.core_type<tc>, window_params = [{transform_indices = @transform_0, window_bounds = array<i64: 16, 8, 32>}, {transform_indices = @transform_1, window_bounds = array<i64: 16, 32>}, {pipeline_mode = #tpu.pipeline_mode<synchronous>, transform_indices = @transform_2, window_bounds = array<i64: 32, 16>}, {pipeline_mode = #tpu.pipeline_mode<synchronous>, transform_indices = @transform_3, window_bounds = array<i64: 32, 16>}, {pipeline_mode = #tpu.pipeline_mode<synchronous>, transform_indices = @transform_4, window_bounds = array<i64: 1, 16>}, {pipeline_mode = #tpu.pipeline_mode<synchronous>, transform_indices = @transform_5, window_bounds = array<i64: 1, 16>}, {transform_indices = @transform_6, window_bounds = array<i64: 16, 32>}, {transform_indices = @transform_7, window_bounds = array<i64: 16, 8>}]} {
    %c0 = arith.constant 0 : index
    %c0_0 = arith.constant 0 : index
    %c0_1 = arith.constant 0 : index
    %0 = vector.load %arg1[%c0, %c0_0, %c0_1] : memref<16x8x32xf32, #tpu.memory_space<vmem>>, vector<16x8x32xf32>
    %c0_2 = arith.constant 0 : index
    %c0_3 = arith.constant 0 : index
    %1 = vector.load %arg3[%c0_2, %c0_3] : memref<32x16xf32, #tpu.memory_space<vmem>>, vector<32x16xf32>
    %cst = arith.constant dense<0.000000e+00> : vector<16x8x16xf32>
    %2 = tpu.matmul %0, %1, %cst {dimension_numbers = #tpu.dot_dimension_numbers<[2], [0], [0, 1], [1], [0, 0, 0, 1, 1, 1], [], []>} : vector<16x8x32xf32>, vector<32x16xf32>, vector<16x8x16xf32> -> vector<16x8x16xf32>
    %c0_4 = arith.constant 0 : index
    %c0_5 = arith.constant 0 : index
    %3 = vector.load %arg2[%c0_4, %c0_5] : memref<16x32xf32, #tpu.memory_space<vmem>>, vector<16x32xf32>
    %c0_6 = arith.constant 0 : index
    %c0_7 = arith.constant 0 : index
    %4 = vector.load %arg4[%c0_6, %c0_7] : memref<32x16xf32, #tpu.memory_space<vmem>>, vector<32x16xf32>
    %cst_8 = arith.constant dense<0.000000e+00> : vector<16x16xf32>
    %5 = tpu.matmul %3, %4, %cst_8 {dimension_numbers = #tpu.dot_dimension_numbers<[1], [0], [0], [1], [0, 0, 1, 1], [], []>} : vector<16x32xf32>, vector<32x16xf32>, vector<16x16xf32> -> vector<16x16xf32>
    %6 = vector.shape_cast %5 : vector<16x16xf32> to vector<16x1x16xf32>
    %7 = vector.broadcast %6 : vector<16x1x16xf32> to vector<16x8x16xf32>
    %8 = arith.addf %2, %7 : vector<16x8x16xf32>
    %c0_9 = arith.constant 0 : index
    %c0_10 = arith.constant 0 : index
    %9 = vector.load %arg6[%c0_9, %c0_10] : memref<1x16xf32, #tpu.memory_space<vmem>>, vector<1x16xf32>
    %10 = vector.shape_cast %9 : vector<1x16xf32> to vector<1x1x16xf32>
    %11 = vector.broadcast %10 : vector<1x1x16xf32> to vector<16x8x16xf32>
    %12 = arith.addf %8, %11 : vector<16x8x16xf32>
    %cst_11 = arith.constant 0.000000e+00 : f32
    %13 = vector.broadcast %cst_11 : f32 to vector<16x8x16xf32>
    %14 = arith.maximumf %12, %13 : vector<16x8x16xf32>
    %c0_12 = arith.constant 0 : index
    %c0_13 = arith.constant 0 : index
    %15 = vector.load %arg5[%c0_12, %c0_13] : memref<1x16xf32, #tpu.memory_space<vmem>>, vector<1x16xf32>
    %16 = vector.shape_cast %15 : vector<1x16xf32> to vector<1x1x16xf32>
    %17 = vector.broadcast %16 : vector<1x1x16xf32> to vector<16x8x16xf32>
    %18 = arith.mulf %14, %17 : vector<16x8x16xf32>
    %cst_14 = arith.constant dense<0.000000e+00> : vector<16x8xf32>
    %19 = vector.multi_reduction <add>, %18, %cst_14 [2] : vector<16x8x16xf32> to vector<16x8xf32>
    %cst_15 = arith.constant dense<0xFF800000> : vector<16xf32>
    %20 = vector.multi_reduction <maximumf>, %19, %cst_15 [1] : vector<16x8xf32> to vector<16xf32>
    %21 = vector.shape_cast %20 : vector<16xf32> to vector<16x1xf32>
    %22 = vector.broadcast %21 : vector<16x1xf32> to vector<16x8xf32>
    %23 = arith.subf %19, %22 : vector<16x8xf32>
    %24 = math.exp %23 : vector<16x8xf32>
    %cst_16 = arith.constant dense<0.000000e+00> : vector<16xf32>
    %25 = vector.multi_reduction <add>, %24, %cst_16 [1] : vector<16x8xf32> to vector<16xf32>
    %26 = vector.shape_cast %25 : vector<16xf32> to vector<16x1xf32>
    %27 = vector.broadcast %26 : vector<16x1xf32> to vector<16x8xf32>
    %28 = arith.divf %24, %27 : vector<16x8xf32>
    %29 = vector.shape_cast %28 : vector<16x8xf32> to vector<16x8x1xf32>
    %30 = vector.broadcast %29 : vector<16x8x1xf32> to vector<16x8x32xf32>
    %31 = arith.mulf %0, %30 : vector<16x8x32xf32>
    %cst_17 = arith.constant dense<0.000000e+00> : vector<16x32xf32>
    %32 = vector.multi_reduction <add>, %31, %cst_17 [1] : vector<16x8x32xf32> to vector<16x32xf32>
    %c0_18 = arith.constant 0 : index
    %c0_19 = arith.constant 0 : index
    %33 = vector.load %arg7[%c0_18, %c0_19] : memref<16x32xf32, #tpu.memory_space<vmem>>, vector<16x32xf32>
    tpu.vector_store %arg7[%c0_18, %c0_19], %32 {strides = array<i32>} : memref<16x32xf32, #tpu.memory_space<vmem>>, vector<16x32xf32>,
    %c0_20 = arith.constant 0 : index
    %c0_21 = arith.constant 0 : index
    %34 = vector.load %arg8[%c0_20, %c0_21] : memref<16x8xf32, #tpu.memory_space<vmem>>, vector<16x8xf32>
    tpu.vector_store %arg8[%c0_20, %c0_21], %28 {strides = array<i32>} : memref<16x8xf32, #tpu.memory_space<vmem>>, vector<16x8xf32>,
    return
  }
  func.func @transform_0(%arg0: i32) -> (i32, i32, i32) {
    %c0_i32 = arith.constant 0 : i32
    %c0_i32_0 = arith.constant 0 : i32
    %c0_i32_1 = arith.constant 0 : i32
    return %arg0, %c0_i32, %c0_i32_0 : i32, i32, i32
  }
  func.func @transform_1(%arg0: i32) -> (i32, i32) {
    %c0_i32 = arith.constant 0 : i32
    %c0_i32_0 = arith.constant 0 : i32
    return %arg0, %c0_i32 : i32, i32
  }
  func.func @transform_2(%arg0: i32) -> (i32, i32) {
    %c0_i32 = arith.constant 0 : i32
    %c0_i32_0 = arith.constant 0 : i32
    %c0_i32_1 = arith.constant 0 : i32
    return %c0_i32, %c0_i32_0 : i32, i32
  }
  func.func @transform_3(%arg0: i32) -> (i32, i32) {
    %c0_i32 = arith.constant 0 : i32
    %c0_i32_0 = arith.constant 0 : i32
    %c0_i32_1 = arith.constant 0 : i32
    return %c0_i32, %c0_i32_0 : i32, i32
  }
  func.func @transform_4(%arg0: i32) -> (i32, i32) {
    %c0_i32 = arith.constant 0 : i32
    %c0_i32_0 = arith.constant 0 : i32
    %c0_i32_1 = arith.constant 0 : i32
    return %c0_i32, %c0_i32_0 : i32, i32
  }
  func.func @transform_5(%arg0: i32) -> (i32, i32) {
    %c0_i32 = arith.constant 0 : i32
    %c0_i32_0 = arith.constant 0 : i32
    %c0_i32_1 = arith.constant 0 : i32
    return %c0_i32, %c0_i32_0 : i32, i32
  }
  func.func @transform_6(%arg0: i32) -> (i32, i32) {
    %c0_i32 = arith.constant 0 : i32
    %c0_i32_0 = arith.constant 0 : i32
    return %arg0, %c0_i32 : i32, i32
  }
  func.func @transform_7(%arg0: i32) -> (i32, i32) {
    %c0_i32 = arith.constant 0 : i32
    %c0_i32_0 = arith.constant 0 : i32
    return %arg0, %c0_i32 : i32, i32
  }
}

</mosaic_0001>

<llo_original>
// kernel: tpu_custom_call.1
$region0: #{tpu_custom_call.1}
  #allocation0 [shape = 'u32[]', space=smem, size = 0x4, offset = 0x4, fixed_abs, tag = 'smem constant byte address 0x4 - core index']
  #allocation1 [shape = 'u32[144,128]{1,0:T(1,128)}', space=vmem, size = 0x12000, scoped, tag = 'internal scratch']
  %s0 = inlined_call_operand.hbm [shape: f32[16,8,32], index: 0, kind: input, shape index: {}]
  %s1 = inlined_call_operand.vmem [shape: f32[16,32], index: 1, kind: input, shape index: {}]
  %s2 = inlined_call_operand.vmem [shape: f32[32,16], index: 2, kind: input, shape index: {}]
  %s3 = inlined_call_operand.vmem [shape: f32[32,16], index: 3, kind: input, shape index: {}]
  %s4 = inlined_call_operand.vmem [shape: f32[1,16], index: 4, kind: input, shape index: {}]
  %s5 = inlined_call_operand.vmem [shape: f32[1,16], index: 5, kind: input, shape index: {}]
  %s6 = inlined_call_operand.hbm [shape: f32[16,32], index: 6, kind: output, shape index: {0}]
  %s7 = inlined_call_operand.vmem [shape: f32[16,8], index: 7, kind: output, shape index: {1}]
  %8 = xla_tuple %s6, %s7
  %s9 = sld [smem:[#allocation0]]
  $region46: #{tpu_custom_call.1} parent=0
    _
  %s11 = ssub.s32 1, %s9
  %s12 = scalar_select 0, %s11, %s9
  $region1: #{tpu_custom_call.1} parent=0
    #allocation2 [shape = 'u8[65536]{0}', space=vmem, size = 0x10000, scoped, tag = 'input window, operand 0, single buffered']
    #allocation3 [shape = 's32[1]{0}', space=sflag, size = 0x4, scoped, tag = 'scoped memory for tpu_custom_call.1']
    #allocation4 [shape = 's32[1]{0}', space=sflag, size = 0x4, scoped, tag = 'scoped memory for tpu_custom_call.1']
    #allocation5 [shape = 'u8[8192]{0}', space=vmem, size = 0x2000, scoped, tag = 'output window, operand 0, single buffered']
    %13 = vsyncpa [#allocation3], 0
    %14 = vsyncpa [#allocation4], 0
    // Predicated region
    $region2: #{tpu_custom_call.1} parent=1 // pred_check
      _
    $region3: #{tpu_custom_call.1} parent=1 // pred_check_branch
      %16 = sbr.rel (0) target = $region5
    $region4: #{tpu_custom_call.1} parent=1 // pred_region
      %s18 = ssub.s32 2048, 2048
      %19 = vsyncadd [#allocation3], %s18
      %s20 = sshll.u32 [#allocation2], 4
      %s21 = int_to_ptr.vmem [resolvable:$true] %s20
      %26 = dma.hbm_to_vmem [thread:$0]  %s0, 2048, %s21, [#allocation3], 128, 128, 8
    $region5: #{tpu_custom_call.1} parent=1 // pred_fallthru
      _
    // Predicated region
    $region6: #{tpu_custom_call.1} parent=1 // pred_check
      _
    $region7: #{tpu_custom_call.1} parent=1 // pred_check_branch
      %28 = sbr.rel (0) target = $region9
    $region8: #{tpu_custom_call.1} parent=1 // pred_region
      _
    $region9: #{tpu_custom_call.1} parent=1 // pred_fallthru
      _
    // Predicated region
    $region10: #{tpu_custom_call.1} parent=1 // pred_check
      _
    $region11: #{tpu_custom_call.1} parent=1 // pred_check_branch
      %30 = sbr.rel (0) target = $region13
    $region12: #{tpu_custom_call.1} parent=1 // pred_region
      _
    $region13: #{tpu_custom_call.1} parent=1 // pred_fallthru
      _
    // Predicated region
    $region14: #{tpu_custom_call.1} parent=1 // pred_check
      _
    $region15: #{tpu_custom_call.1} parent=1 // pred_check_branch
      %32 = sbr.rel (0) target = $region17
    $region16: #{tpu_custom_call.1} parent=1 // pred_region
      _
    $region17: #{tpu_custom_call.1} parent=1 // pred_fallthru
      _
    // Predicated region
    $region18: #{tpu_custom_call.1} parent=1 // pred_check
      _
    $region19: #{tpu_custom_call.1} parent=1 // pred_check_branch
      %34 = sbr.rel (0) target = $region21
    $region20: #{tpu_custom_call.1} parent=1 // pred_region
      _
    $region21: #{tpu_custom_call.1} parent=1 // pred_fallthru
      _
    // Predicated region
    $region22: #{tpu_custom_call.1} parent=1 // pred_check
      _
    $region23: #{tpu_custom_call.1} parent=1 // pred_check_branch
      %36 = sbr.rel (0) target = $region25
    $region24: #{tpu_custom_call.1} parent=1 // pred_region
      _
    $region25: #{tpu_custom_call.1} parent=1 // pred_fallthru
      _
    // Predicated region
    $region26: #{tpu_custom_call.1} parent=1 // pred_check
      _
    $region27: #{tpu_custom_call.1} parent=1 // pred_check_branch
      %38 = sbr.rel (0) target = $region29
    $region28: #{tpu_custom_call.1} parent=1 // pred_region
      %39 = dma.done [#allocation3], 2048
    $region29: #{tpu_custom_call.1} parent=1 // pred_fallthru
      _
    %v40 = vld [vmem:[#allocation2] sm:$0xff]
    %v41 = vld [vmem:[#allocation2 + $0x8] sm:$0xff]
    %v42 = vld [vmem:[#allocation2 + $0x10] sm:$0xff]
    %v43 = vld [vmem:[#allocation2 + $0x18] sm:$0xff]
    %v44 = vld [vmem:[#allocation2 + $0x20] sm:$0xff]
    %v45 = vld [vmem:[#allocation2 + $0x28] sm:$0xff]
    %v46 = vld [vmem:[#allocation2 + $0x30] sm:$0xff]
    %v47 = vld [vmem:[#allocation2 + $0x38] sm:$0xff]
    %v48 = vld [vmem:[#allocation2 + $0x40] sm:$0xff]
    %v49 = vld [vmem:[#allocation2 + $0x48] sm:$0xff]
    %v50 = vld [vmem:[#allocation2 + $0x50] sm:$0xff]
    %v51 = vld [vmem:[#allocation2 + $0x58] sm:$0xff]
    %v52 = vld [vmem:[#allocation2 + $0x60] sm:$0xff]
    %v53 = vld [vmem:[#allocation2 + $0x68] sm:$0xff]
    %v54 = vld [vmem:[#allocation2 + $0x70] sm:$0xff]
    %v55 = vld [vmem:[#allocation2 + $0x78] sm:$0xff]
    %v56 = vld [vmem:[%s2] sm:$0xff]
    %v57 = vld [vmem:[%s2 + $0x8] sm:$0xff]
    %v58 = vld [vmem:[%s2 + $0x10] sm:$0xff]
    %v59 = vld [vmem:[%s2 + $0x18] sm:$0xff]
    %v60 = vld [vmem:[%s1] sm:$0xff]
    %v61 = vld [vmem:[%s1 + $0x8] sm:$0xff]
    %v62 = vld [vmem:[%s3] sm:$0xff]
    %v63 = vld [vmem:[%s3 + $0x8] sm:$0xff]
    %v64 = vld [vmem:[%s3 + $0x10] sm:$0xff]
    %v65 = vld [vmem:[%s3 + $0x18] sm:$0xff]
    %vm66 = vcmask 261120
    %v68 = vsel %vm66, %v60, 0
    %v71 = vsel %vm66, %v61, 0
    %73 = vmatprep.subr.mxu0 0.0
    %74 = vmatpush1.msra.mxu0 0.0
    %75 = vmatprep.subr.mxu0 0.0
    %76 = vmatpush1.msra.mxu0 0.0
    %77 = vmatprep.subr.mxu0 0.0
    %78 = vmatpush1.msra.mxu0 0.0
    %79 = vmatprep.subr.mxu0 0.0
    %80 = vmatpush1.msra.mxu0 0.0
    %81 = vmatprep.subr.mxu0 0.0
    %82 = vmatpush1.msra.mxu0 0.0
    %83 = vmatprep.subr.mxu0 0.0
    %84 = vmatpush1.msra.mxu0 0.0
    %85 = vmatprep.subr.mxu0 0.0
    %86 = vmatpush1.msra.mxu0 0.0
    %87 = vmatprep.subr.mxu0 0.0
    %88 = vmatpush1.msra.mxu0 0.0
    %89 = vmatprep.subr.mxu0 0.0
    %90 = vmatpush1.msra.mxu0 0.0
    %91 = vmatprep.subr.mxu0 0.0
    %92 = vmatpush1.msra.mxu0 0.0
    %93 = vmatprep.subr.mxu0 0.0
    %94 = vmatpush1.msra.mxu0 0.0
    %95 = vmatprep.subr.mxu0 0.0
    %96 = vmatpush1.msra.mxu0 0.0
    %97 = vmatprep.subr.mxu0 0.0
    %98 = vmatpush1.msra.mxu0 %v65
    %99 = vmatprep.subr.mxu0 0.0
    %100 = vmatpush1.msra.mxu0 %v64
    %101 = vmatprep.subr.mxu0 0.0
    %102 = vmatpush1.msra.mxu0 %v63
    %103 = vmatprep.subr.mxu0 0.0
    %104 = vmatpush1.msra.mxu0 %v62
    %105 = vmatprep.subr.mxu0 0.0
    %106 = vmatpush2.msra.mxu0 0.0
    %107 = vmatprep.subr.mxu0 0.0
    %108 = vmatpush2.msra.mxu0 0.0
    %109 = vmatprep.subr.mxu0 0.0
    %110 = vmatpush2.msra.mxu0 0.0
    %111 = vmatprep.subr.mxu0 0.0
    %112 = vmatpush2.msra.mxu0 0.0
    %113 = vmatprep.subr.mxu0 0.0
    %114 = vmatpush2.msra.mxu0 0.0
    %115 = vmatprep.subr.mxu0 0.0
    %116 = vmatpush2.msra.mxu0 0.0
    %117 = vmatprep.subr.mxu0 0.0
    %118 = vmatpush2.msra.mxu0 0.0
    %119 = vmatprep.subr.mxu0 0.0
    %120 = vmatpush2.msra.mxu0 0.0
    %121 = vmatprep.subr.mxu0 0.0
    %122 = vmatpush2.msra.mxu0 0.0
    %123 = vmatprep.subr.mxu0 0.0
    %124 = vmatpush2.msra.mxu0 0.0
    %125 = vmatprep.subr.mxu0 0.0
    %126 = vmatpush2.msra.mxu0 0.0
    %127 = vmatprep.subr.mxu0 0.0
    %128 = vmatpush2.msra.mxu0 0.0
    %129 = vmatprep.subr.mxu0 0.0
    %130 = vmatpush2.msra.mxu0 0.0
    %131 = vmatprep.subr.mxu0 0.0
    %132 = vmatpush2.msra.mxu0 0.0
    %133 = vmatprep.subr.mxu0 0.0
    %134 = vmatpush2.msra.mxu0 0.0
    %135 = vmatprep.subr.mxu0 0.0
    %136 = vmatpush2.msra.mxu0 0.0
    %137 = vmatprep.mubr.f32.mxu0 0.0
    %138 = vmatmul.mubr.f32.gmra.mxu0 %v68
    %v139 = vpop.f32.mrf.mxu0
    %v140 = vadd.f32 0.0, %v139
    %v141 = vpop.f32.mrf.mxu0
    %142 = vmatprep.mubr.f32.mxu0 0.0
    %143 = vmatmul.mubr.f32.gmra.mxu0 %v71
    %v144 = vpop.f32.mrf.mxu0
    %v145 = vadd.f32 0.0, %v144
    %v146 = vpop.f32.mrf.mxu0
    %147 = vdwg.mxu0
    %v150 = vcombine.high %v140, %v140
    %v152 = vunpack.c.l.s4 1966171168
    %v153 = vunpack.c.0.s8 %v152
    %v154 = vlaneseq
    %v155 = vshrl.u32 %v154, 7
    %v156 = vsub.s32 %v153, %v155
    %v157 = vrot.slane %v140, %v156
    %v159 = vunpack.c.l.s4 1966171168
    %v160 = vunpack.c.0.s8 %v159
    %v161 = vlaneseq
    %v162 = vshrl.u32 %v161, 7
    %v163 = vsub.s32 %v160, %v162
    %v164 = vrot.slane %v150, %v163
    %v165 = vcombine.high %v157, %v157
    %v166 = vcombine.high %v164, %v164
    %v168 = vunpack.c.l.s4 1966171168
    %v169 = vunpack.c.0.s8 %v168
    %v170 = vlaneseq
    %v171 = vshrl.u32 %v170, 7
    %v172 = vsub.s32 %v169, %v171
    %v173 = vrot.slane %v157, %v172
    %v175 = vunpack.c.l.s4 1966171168
    %v176 = vunpack.c.0.s8 %v175
    %v177 = vlaneseq
    %v178 = vshrl.u32 %v177, 7
    %v179 = vsub.s32 %v176, %v178
    %v180 = vrot.slane %v164, %v179
    %v182 = vunpack.c.l.s4 1966171168
    %v183 = vunpack.c.0.s8 %v182
    %v184 = vlaneseq
    %v185 = vshrl.u32 %v184, 7
    %v186 = vsub.s32 %v183, %v185
    %v187 = vrot.slane %v165, %v186
    %v189 = vunpack.c.l.s4 1966171168
    %v190 = vunpack.c.0.s8 %v189
    %v191 = vlaneseq
    %v192 = vshrl.u32 %v191, 7
    %v193 = vsub.s32 %v190, %v192
    %v194 = vrot.slane %v166, %v193
    %v195 = vcombine.high %v173, %v173
    %v196 = vcombine.high %v180, %v180
    %v197 = vcombine.high %v187, %v187
    %v198 = vcombine.high %v194, %v194
    %v199 = vcombine.high %v145, %v145
    %v201 = vunpack.c.l.s4 1966171168
    %v202 = vunpack.c.0.s8 %v201
    %v203 = vlaneseq
    %v204 = vshrl.u32 %v203, 7
    %v205 = vsub.s32 %v202, %v204
    %v206 = vrot.slane %v145, %v205
    %v208 = vunpack.c.l.s4 1966171168
    %v209 = vunpack.c.0.s8 %v208
    %v210 = vlaneseq
    %v211 = vshrl.u32 %v210, 7
    %v212 = vsub.s32 %v209, %v211
    %v213 = vrot.slane %v199, %v212
    %v214 = vcombine.high %v206, %v206
    %v215 = vcombine.high %v213, %v213
    %v217 = vunpack.c.l.s4 1966171168
    %v218 = vunpack.c.0.s8 %v217
    %v219 = vlaneseq
    %v220 = vshrl.u32 %v219, 7
    %v221 = vsub.s32 %v218, %v220
    %v222 = vrot.slane %v206, %v221
    %v224 = vunpack.c.l.s4 1966171168
    %v225 = vunpack.c.0.s8 %v224
    %v226 = vlaneseq
    %v227 = vshrl.u32 %v226, 7
    %v228 = vsub.s32 %v225, %v227
    %v229 = vrot.slane %v213, %v228
    %v231 = vunpack.c.l.s4 1966171168
    %v232 = vunpack.c.0.s8 %v231
    %v233 = vlaneseq
    %v234 = vshrl.u32 %v233, 7
    %v235 = vsub.s32 %v232, %v234
    %v236 = vrot.slane %v214, %v235
    %v238 = vunpack.c.l.s4 1966171168
    %v239 = vunpack.c.0.s8 %v238
    %v240 = vlaneseq
    %v241 = vshrl.u32 %v240, 7
    %v242 = vsub.s32 %v239, %v241
    %v243 = vrot.slane %v215, %v242
    %v244 = vcombine.high %v222, %v222
    %v245 = vcombine.high %v229, %v229
    %v246 = vcombine.high %v236, %v236
    %v247 = vcombine.high %v243, %v243
    %v248 = vlaneseq
    %v249 = vshrl.u32 %v248, 7
    %v250 = vsub.s32 0, %v249
    %v251 = vrot.slane %v173, %v250
    %v252 = vlaneseq
    %v253 = vshrl.u32 %v252, 7
    %v254 = vsub.s32 0, %v253
    %v255 = vrot.slane %v187, %v254
    %v256 = vlaneseq
    %v257 = vshrl.u32 %v256, 7
    %v258 = vsub.s32 0, %v257
    %v259 = vrot.slane %v195, %v258
    %v260 = vlaneseq
    %v261 = vshrl.u32 %v260, 7
    %v262 = vsub.s32 0, %v261
    %v263 = vrot.slane %v197, %v262
    %v264 = vlaneseq
    %v265 = vshrl.u32 %v264, 7
    %v266 = vsub.s32 0, %v265
    %v267 = vrot.slane %v180, %v266
    %v268 = vlaneseq
    %v269 = vshrl.u32 %v268, 7
    %v270 = vsub.s32 0, %v269
    %v271 = vrot.slane %v194, %v270
    %v272 = vlaneseq
    %v273 = vshrl.u32 %v272, 7
    %v274 = vsub.s32 0, %v273
    %v275 = vrot.slane %v196, %v274
    %v276 = vlaneseq
    %v277 = vshrl.u32 %v276, 7
    %v278 = vsub.s32 0, %v277
    %v279 = vrot.slane %v198, %v278
    %v280 = vlaneseq
    %v281 = vshrl.u32 %v280, 7
    %v282 = vsub.s32 0, %v281
    %v283 = vrot.slane %v222, %v282
    %v284 = vlaneseq
    %v285 = vshrl.u32 %v284, 7
    %v286 = vsub.s32 0, %v285
    %v287 = vrot.slane %v236, %v286
    %v288 = vlaneseq
    %v289 = vshrl.u32 %v288, 7
    %v290 = vsub.s32 0, %v289
    %v291 = vrot.slane %v244, %v290
    %v292 = vlaneseq
    %v293 = vshrl.u32 %v292, 7
    %v294 = vsub.s32 0, %v293
    %v295 = vrot.slane %v246, %v294
    %v296 = vlaneseq
    %v297 = vshrl.u32 %v296, 7
    %v298 = vsub.s32 0, %v297
    %v299 = vrot.slane %v229, %v298
    %v300 = vlaneseq
    %v301 = vshrl.u32 %v300, 7
    %v302 = vsub.s32 0, %v301
    %v303 = vrot.slane %v243, %v302
    %v304 = vlaneseq
    %v305 = vshrl.u32 %v304, 7
    %v306 = vsub.s32 0, %v305
    %v307 = vrot.slane %v245, %v306
    %v308 = vlaneseq
    %v309 = vshrl.u32 %v308, 7
    %v310 = vsub.s32 0, %v309
    %v311 = vrot.slane %v247, %v310
    %v329 = vsel %vm66, %v40, 0
    %v332 = vsel %vm66, %v41, 0
    %v335 = vsel %vm66, %v42, 0
    %v338 = vsel %vm66, %v43, 0
    %v341 = vsel %vm66, %v44, 0
    %v344 = vsel %vm66, %v45, 0
    %v347 = vsel %vm66, %v46, 0
    %v350 = vsel %vm66, %v47, 0
    %v353 = vsel %vm66, %v48, 0
    %v356 = vsel %vm66, %v49, 0
    %v359 = vsel %vm66, %v50, 0
    %v362 = vsel %vm66, %v51, 0
    %v365 = vsel %vm66, %v52, 0
    %v368 = vsel %vm66, %v53, 0
    %v371 = vsel %vm66, %v54, 0
    %v374 = vsel %vm66, %v55, 0
    %376 = vmatprep.subr.mxu0 0.0
    %377 = vmatpush1.msra.mxu0 0.0
    %378 = vmatprep.subr.mxu0 0.0
    %379 = vmatpush1.msra.mxu0 0.0
    %380 = vmatprep.subr.mxu0 0.0
    %381 = vmatpush1.msra.mxu0 0.0
    %382 = vmatprep.subr.mxu0 0.0
    %383 = vmatpush1.msra.mxu0 0.0
    %384 = vmatprep.subr.mxu0 0.0
    %385 = vmatpush1.msra.mxu0 0.0
    %386 = vmatprep.subr.mxu0 0.0
    %387 = vmatpush1.msra.mxu0 0.0
    %388 = vmatprep.subr.mxu0 0.0
    %389 = vmatpush1.msra.mxu0 0.0
    %390 = vmatprep.subr.mxu0 0.0
    %391 = vmatpush1.msra.mxu0 0.0
    %392 = vmatprep.subr.mxu0 0.0
    %393 = vmatpush1.msra.mxu0 0.0
    %394 = vmatprep.subr.mxu0 0.0
    %395 = vmatpush1.msra.mxu0 0.0
    %396 = vmatprep.subr.mxu0 0.0
    %397 = vmatpush1.msra.mxu0 0.0
    %398 = vmatprep.subr.mxu0 0.0
    %399 = vmatpush1.msra.mxu0 0.0
    %400 = vmatprep.subr.mxu0 0.0
    %401 = vmatpush1.msra.mxu0 %v59
    %402 = vmatprep.subr.mxu0 0.0
    %403 = vmatpush1.msra.mxu0 %v58
    %404 = vmatprep.subr.mxu0 0.0
    %405 = vmatpush1.msra.mxu0 %v57
    %406 = vmatprep.subr.mxu0 0.0
    %407 = vmatpush1.msra.mxu0 %v56
    %408 = vmatprep.subr.mxu0 0.0
    %409 = vmatpush2.msra.mxu0 0.0
    %410 = vmatprep.subr.mxu0 0.0
    %411 = vmatpush2.msra.mxu0 0.0
    %412 = vmatprep.subr.mxu0 0.0
    %413 = vmatpush2.msra.mxu0 0.0
    %414 = vmatprep.subr.mxu0 0.0
    %415 = vmatpush2.msra.mxu0 0.0
    %416 = vmatprep.subr.mxu0 0.0
    %417 = vmatpush2.msra.mxu0 0.0
    %418 = vmatprep.subr.mxu0 0.0
    %419 = vmatpush2.msra.mxu0 0.0
    %420 = vmatprep.subr.mxu0 0.0
    %421 = vmatpush2.msra.mxu0 0.0
    %422 = vmatprep.subr.mxu0 0.0
    %423 = vmatpush2.msra.mxu0 0.0
    %424 = vmatprep.subr.mxu0 0.0
    %425 = vmatpush2.msra.mxu0 0.0
    %426 = vmatprep.subr.mxu0 0.0
    %427 = vmatpush2.msra.mxu0 0.0
    %428 = vmatprep.subr.mxu0 0.0
    %429 = vmatpush2.msra.mxu0 0.0
    %430 = vmatprep.subr.mxu0 0.0
    %431 = vmatpush2.msra.mxu0 0.0
    %432 = vmatprep.subr.mxu0 0.0
    %433 = vmatpush2.msra.mxu0 0.0
    %434 = vmatprep.subr.mxu0 0.0
    %435 = vmatpush2.msra.mxu0 0.0
    %436 = vmatprep.subr.mxu0 0.0
    %437 = vmatpush2.msra.mxu0 0.0
    %438 = vmatprep.subr.mxu0 0.0
    %439 = vmatpush2.msra.mxu0 0.0
    %440 = vmatprep.mubr.f32.mxu0 0.0
    %441 = vmatmul.mubr.f32.gmra.mxu0 %v329
    %v442 = vpop.f32.mrf.mxu0
    %v443 = vadd.f32 %v251, %v442
    %v444 = vpop.f32.mrf.mxu0
    %445 = vmatprep.mubr.f32.mxu0 0.0
    %446 = vmatmul.mubr.f32.gmra.mxu0 %v332
    %v447 = vpop.f32.mrf.mxu0
    %v448 = vadd.f32 %v255, %v447
    %v449 = vpop.f32.mrf.mxu0
    %450 = vmatprep.mubr.f32.mxu0 0.0
    %451 = vmatmul.mubr.f32.gmra.mxu0 %v335
    %v452 = vpop.f32.mrf.mxu0
    %v453 = vadd.f32 %v259, %v452
    %v454 = vpop.f32.mrf.mxu0
    %455 = vmatprep.mubr.f32.mxu0 0.0
    %456 = vmatmul.mubr.f32.gmra.mxu0 %v338
    %v457 = vpop.f32.mrf.mxu0
    %v458 = vadd.f32 %v263, %v457
    %v459 = vpop.f32.mrf.mxu0
    %460 = vmatprep.mubr.f32.mxu0 0.0
    %461 = vmatmul.mubr.f32.gmra.mxu0 %v341
    %v462 = vpop.f32.mrf.mxu0
    %v463 = vadd.f32 %v267, %v462
    %v464 = vpop.f32.mrf.mxu0
    %465 = vmatprep.mubr.f32.mxu0 0.0
    %466 = vmatmul.mubr.f32.gmra.mxu0 %v344
    %v467 = vpop.f32.mrf.mxu0
    %v468 = vadd.f32 %v271, %v467
    %v469 = vpop.f32.mrf.mxu0
    %470 = vmatprep.mubr.f32.mxu0 0.0
    %471 = vmatmul.mubr.f32.gmra.mxu0 %v347
    %v472 = vpop.f32.mrf.mxu0
    %v473 = vadd.f32 %v275, %v472
    %v474 = vpop.f32.mrf.mxu0
    %475 = vmatprep.mubr.f32.mxu0 0.0
    %476 = vmatmul.mubr.f32.gmra.mxu0 %v350
    %v477 = vpop.f32.mrf.mxu0
    %v478 = vadd.f32 %v279, %v477
    %v479 = vpop.f32.mrf.mxu0
    %480 = vmatprep.mubr.f32.mxu0 0.0
    %481 = vmatmul.mubr.f32.gmra.mxu0 %v353
    %v482 = vpop.f32.mrf.mxu0
    %v483 = vadd.f32 %v283, %v482
    %v484 = vpop.f32.mrf.mxu0
    %485 = vmatprep.mubr.f32.mxu0 0.0
    %486 = vmatmul.mubr.f32.gmra.mxu0 %v356
    %v487 = vpop.f32.mrf.mxu0
    %v488 = vadd.f32 %v287, %v487
    %v489 = vpop.f32.mrf.mxu0
    %490 = vmatprep.mubr.f32.mxu0 0.0
    %491 = vmatmul.mubr.f32.gmra.mxu0 %v359
    %v492 = vpop.f32.mrf.mxu0
    %v493 = vadd.f32 %v291, %v492
    %v494 = vpop.f32.mrf.mxu0
    %495 = vmatprep.mubr.f32.mxu0 0.0
    %496 = vmatmul.mubr.f32.gmra.mxu0 %v362
    %v497 = vpop.f32.mrf.mxu0
    %v498 = vadd.f32 %v295, %v497
    %v499 = vpop.f32.mrf.mxu0
    %500 = vmatprep.mubr.f32.mxu0 0.0
    %501 = vmatmul.mubr.f32.gmra.mxu0 %v365
    %v502 = vpop.f32.mrf.mxu0
    %v503 = vadd.f32 %v299, %v502
    %v504 = vpop.f32.mrf.mxu0
    %505 = vmatprep.mubr.f32.mxu0 0.0
    %506 = vmatmul.mubr.f32.gmra.mxu0 %v368
    %v507 = vpop.f32.mrf.mxu0
    %v508 = vadd.f32 %v303, %v507
    %v509 = vpop.f32.mrf.mxu0
    %510 = vmatprep.mubr.f32.mxu0 0.0
    %511 = vmatmul.mubr.f32.gmra.mxu0 %v371
    %v512 = vpop.f32.mrf.mxu0
    %v513 = vadd.f32 %v307, %v512
    %v514 = vpop.f32.mrf.mxu0
    %515 = vmatprep.mubr.f32.mxu0 0.0
    %516 = vmatmul.mubr.f32.gmra.mxu0 %v374
    %v517 = vpop.f32.mrf.mxu0
    %v518 = vadd.f32 %v311, %v517
    %v519 = vpop.f32.mrf.mxu0
    %520 = vdwg.mxu0
    %v521 = vld [vmem:[%s5] sm:$0x1]
    %v523 = vlaneseq
    %v524 = vshrl.u32 %v523, 7
    %v525 = vsub.s32 0, %v524
    %v526 = vrot.slane %v521, %v525
    %v528 = vadd.f32 %v443, %v526
    %v529 = vadd.f32 %v448, %v526
    %v530 = vadd.f32 %v453, %v526
    %v531 = vadd.f32 %v458, %v526
    %v532 = vadd.f32 %v463, %v526
    %v533 = vadd.f32 %v468, %v526
    %v534 = vadd.f32 %v473, %v526
    %v535 = vadd.f32 %v478, %v526
    %v536 = vadd.f32 %v483, %v526
    %v537 = vadd.f32 %v488, %v526
    %v538 = vadd.f32 %v493, %v526
    %v539 = vadd.f32 %v498, %v526
    %v540 = vadd.f32 %v503, %v526
    %v541 = vadd.f32 %v508, %v526
    %v542 = vadd.f32 %v513, %v526
    %v543 = vadd.f32 %v518, %v526
    %v544 = vmax.f32 %v528, 0.0
    %v545 = vmax.f32 %v529, 0.0
    %v546 = vmax.f32 %v530, 0.0
    %v547 = vmax.f32 %v531, 0.0
    %v548 = vmax.f32 %v532, 0.0
    %v549 = vmax.f32 %v533, 0.0
    %v550 = vmax.f32 %v534, 0.0
    %v551 = vmax.f32 %v535, 0.0
    %v552 = vmax.f32 %v536, 0.0
    %v553 = vmax.f32 %v537, 0.0
    %v554 = vmax.f32 %v538, 0.0
    %v555 = vmax.f32 %v539, 0.0
    %v556 = vmax.f32 %v540, 0.0
    %v557 = vmax.f32 %v541, 0.0
    %v558 = vmax.f32 %v542, 0.0
    %v559 = vmax.f32 %v543, 0.0
    %v560 = vld [vmem:[%s4] sm:$0x1]
    %v562 = vlaneseq
    %v563 = vshrl.u32 %v562, 7
    %v564 = vsub.s32 0, %v563
    %v565 = vrot.slane %v560, %v564
    %v567 = vmul.f32 %v544, %v565
    %v568 = vmul.f32 %v545, %v565
    %v569 = vmul.f32 %v546, %v565
    %v570 = vmul.f32 %v547, %v565
    %v571 = vmul.f32 %v548, %v565
    %v572 = vmul.f32 %v549, %v565
    %v573 = vmul.f32 %v550, %v565
    %v574 = vmul.f32 %v551, %v565
    %v575 = vmul.f32 %v552, %v565
    %v576 = vmul.f32 %v553, %v565
    %v577 = vmul.f32 %v554, %v565
    %v578 = vmul.f32 %v555, %v565
    %v579 = vmul.f32 %v556, %v565
    %v580 = vmul.f32 %v557, %v565
    %v581 = vmul.f32 %v558, %v565
    %v582 = vmul.f32 %v559, %v565
    %vm583 = vcmask 130048
    %v584 = vsel %vm583, %v567, 0.0
    %585 = vadd.xlane.f32.xlu0 %v584
    %v586 = vpop.xlane.xlu0 %585
    %v587 = vsel %vm583, %v568, 0.0
    %588 = vadd.xlane.f32.xlu0 %v587
    %v589 = vpop.xlane.xlu0 %588
    %v590 = vsel %vm583, %v569, 0.0
    %591 = vadd.xlane.f32.xlu0 %v590
    %v592 = vpop.xlane.xlu0 %591
    %v593 = vsel %vm583, %v570, 0.0
    %594 = vadd.xlane.f32.xlu0 %v593
    %v595 = vpop.xlane.xlu0 %594
    %v596 = vsel %vm583, %v571, 0.0
    %597 = vadd.xlane.f32.xlu0 %v596
    %v598 = vpop.xlane.xlu0 %597
    %v599 = vsel %vm583, %v572, 0.0
    %600 = vadd.xlane.f32.xlu0 %v599
    %v601 = vpop.xlane.xlu0 %600
    %v602 = vsel %vm583, %v573, 0.0
    %603 = vadd.xlane.f32.xlu0 %v602
    %v604 = vpop.xlane.xlu0 %603
    %v605 = vsel %vm583, %v574, 0.0
    %606 = vadd.xlane.f32.xlu0 %v605
    %v607 = vpop.xlane.xlu0 %606
    %v608 = vsel %vm583, %v575, 0.0
    %609 = vadd.xlane.f32.xlu0 %v608
    %v610 = vpop.xlane.xlu0 %609
    %v611 = vsel %vm583, %v576, 0.0
    %612 = vadd.xlane.f32.xlu0 %v611
    %v613 = vpop.xlane.xlu0 %612
    %v614 = vsel %vm583, %v577, 0.0
    %615 = vadd.xlane.f32.xlu0 %v614
    %v616 = vpop.xlane.xlu0 %615
    %v617 = vsel %vm583, %v578, 0.0
    %618 = vadd.xlane.f32.xlu0 %v617
    %v619 = vpop.xlane.xlu0 %618
    %v620 = vsel %vm583, %v579, 0.0
    %621 = vadd.xlane.f32.xlu0 %v620
    %v622 = vpop.xlane.xlu0 %621
    %v623 = vsel %vm583, %v580, 0.0
    %624 = vadd.xlane.f32.xlu0 %v623
    %v625 = vpop.xlane.xlu0 %624
    %v626 = vsel %vm583, %v581, 0.0
    %627 = vadd.xlane.f32.xlu0 %v626
    %v628 = vpop.xlane.xlu0 %627
    %v629 = vsel %vm583, %v582, 0.0
    %630 = vadd.xlane.f32.xlu0 %v629
    %v631 = vpop.xlane.xlu0 %630
    %v648 = vlaneseq
    %v649 = vand.u32 %v648, 127
    %v650 = vlaneseq
    %v651 = vshrl.u32 %v650, 7
    %v652 = vsub.s32 %v649, %v651
    %v653 = vrot.slane %v586, %v652
    %v654 = vlaneseq
    %v655 = vshrl.u32 %v654, 7
    %v656 = vsub.s32 %v649, %v655
    %v657 = vrot.slane %v589, %v656
    %v658 = vlaneseq
    %v659 = vshrl.u32 %v658, 7
    %v660 = vsub.s32 %v649, %v659
    %v661 = vrot.slane %v592, %v660
    %v662 = vlaneseq
    %v663 = vshrl.u32 %v662, 7
    %v664 = vsub.s32 %v649, %v663
    %v665 = vrot.slane %v595, %v664
    %v666 = vlaneseq
    %v667 = vshrl.u32 %v666, 7
    %v668 = vsub.s32 %v649, %v667
    %v669 = vrot.slane %v598, %v668
    %v670 = vlaneseq
    %v671 = vshrl.u32 %v670, 7
    %v672 = vsub.s32 %v649, %v671
    %v673 = vrot.slane %v601, %v672
    %v674 = vlaneseq
    %v675 = vshrl.u32 %v674, 7
    %v676 = vsub.s32 %v649, %v675
    %v677 = vrot.slane %v604, %v676
    %v678 = vlaneseq
    %v679 = vshrl.u32 %v678, 7
    %v680 = vsub.s32 %v649, %v679
    %v681 = vrot.slane %v607, %v680
    %v682 = vlaneseq
    %v683 = vshrl.u32 %v682, 7
    %v684 = vsub.s32 %v649, %v683
    %v685 = vrot.slane %v610, %v684
    %v686 = vlaneseq
    %v687 = vshrl.u32 %v686, 7
    %v688 = vsub.s32 %v649, %v687
    %v689 = vrot.slane %v613, %v688
    %v690 = vlaneseq
    %v691 = vshrl.u32 %v690, 7
    %v692 = vsub.s32 %v649, %v691
    %v693 = vrot.slane %v616, %v692
    %v694 = vlaneseq
    %v695 = vshrl.u32 %v694, 7
    %v696 = vsub.s32 %v649, %v695
    %v697 = vrot.slane %v619, %v696
    %v698 = vlaneseq
    %v699 = vshrl.u32 %v698, 7
    %v700 = vsub.s32 %v649, %v699
    %v701 = vrot.slane %v622, %v700
    %v702 = vlaneseq
    %v703 = vshrl.u32 %v702, 7
    %v704 = vsub.s32 %v649, %v703
    %v705 = vrot.slane %v625, %v704
    %v706 = vlaneseq
    %v707 = vshrl.u32 %v706, 7
    %v708 = vsub.s32 %v649, %v707
    %v709 = vrot.slane %v628, %v708
    %v710 = vlaneseq
    %v711 = vshrl.u32 %v710, 7
    %v712 = vsub.s32 %v649, %v711
    %v713 = vrot.slane %v631, %v712
    %vm714 = vcmask 1041409
    %v715 = vsel %vm714, %v657, %v653
    %vm716 = vcmask 1042434
    %v717 = vsel %vm716, %v661, %v715
    %vm718 = vcmask 1043459
    %v719 = vsel %vm718, %v665, %v717
    %vm720 = vcmask 1044484
    %v721 = vsel %vm720, %v669, %v719
    %vm722 = vcmask 1045509
    %v723 = vsel %vm722, %v673, %v721
    %vm724 = vcmask 1046534
    %v725 = vsel %vm724, %v677, %v723
    %vm726 = vcmask 1047559
    %v727 = vsel %vm726, %v681, %v725
    %v728 = vsel %vm714, %v689, %v685
    %v729 = vsel %vm716, %v693, %v728
    %v730 = vsel %vm718, %v697, %v729
    %v731 = vsel %vm720, %v701, %v730
    %v732 = vsel %vm722, %v705, %v731
    %v733 = vsel %vm724, %v709, %v732
    %v734 = vsel %vm726, %v713, %v733
    %vm737 = vcmask 64512
    %v738 = vsel %vm737, %v727, -inf
    %739 = vmax.xlane.f32.xlu0 %v738
    %v740 = vpop.xlane.xlu0 %739
    %v741 = vsel %vm737, %v734, -inf
    %742 = vmax.xlane.f32.xlu0 %v741
    %v743 = vpop.xlane.xlu0 %742
    %v746 = vlaneseq
    %v747 = vshrl.u32 %v746, 7
    %v748 = vsub.s32 0, %v747
    %v749 = vrot.slane %v740, %v748
    %v750 = vlaneseq
    %v751 = vshrl.u32 %v750, 7
    %v752 = vsub.s32 1, %v751
    %v753 = vrot.slane %v740, %v752
    %v754 = vlaneseq
    %v755 = vshrl.u32 %v754, 7
    %v756 = vsub.s32 2, %v755
    %v757 = vrot.slane %v740, %v756
    %v758 = vlaneseq
    %v759 = vshrl.u32 %v758, 7
    %v760 = vsub.s32 3, %v759
    %v761 = vrot.slane %v740, %v760
    %v762 = vlaneseq
    %v763 = vshrl.u32 %v762, 7
    %v764 = vsub.s32 4, %v763
    %v765 = vrot.slane %v740, %v764
    %v766 = vlaneseq
    %v767 = vshrl.u32 %v766, 7
    %v768 = vsub.s32 5, %v767
    %v769 = vrot.slane %v740, %v768
    %v770 = vlaneseq
    %v771 = vshrl.u32 %v770, 7
    %v772 = vsub.s32 6, %v771
    %v773 = vrot.slane %v740, %v772
    %v774 = vlaneseq
    %v775 = vshrl.u32 %v774, 7
    %v776 = vsub.s32 7, %v775
    %v777 = vrot.slane %v740, %v776
    %v778 = vlaneseq
    %v779 = vshrl.u32 %v778, 7
    %v780 = vsub.s32 0, %v779
    %v781 = vrot.slane %v743, %v780
    %v782 = vlaneseq
    %v783 = vshrl.u32 %v782, 7
    %v784 = vsub.s32 1, %v783
    %v785 = vrot.slane %v743, %v784
    %v786 = vlaneseq
    %v787 = vshrl.u32 %v786, 7
    %v788 = vsub.s32 2, %v787
    %v789 = vrot.slane %v743, %v788
    %v790 = vlaneseq
    %v791 = vshrl.u32 %v790, 7
    %v792 = vsub.s32 3, %v791
    %v793 = vrot.slane %v743, %v792
    %v794 = vlaneseq
    %v795 = vshrl.u32 %v794, 7
    %v796 = vsub.s32 4, %v795
    %v797 = vrot.slane %v743, %v796
    %v798 = vlaneseq
    %v799 = vshrl.u32 %v798, 7
    %v800 = vsub.s32 5, %v799
    %v801 = vrot.slane %v743, %v800
    %v802 = vlaneseq
    %v803 = vshrl.u32 %v802, 7
    %v804 = vsub.s32 6, %v803
    %v805 = vrot.slane %v743, %v804
    %v806 = vlaneseq
    %v807 = vshrl.u32 %v806, 7
    %v808 = vsub.s32 7, %v807
    %v809 = vrot.slane %v743, %v808
    %v826 = vsub.f32 %v586, %v749
    %v827 = vsub.f32 %v589, %v753
    %v828 = vsub.f32 %v592, %v757
    %v829 = vsub.f32 %v595, %v761
    %v830 = vsub.f32 %v598, %v765
    %v831 = vsub.f32 %v601, %v769
    %v832 = vsub.f32 %v604, %v773
    %v833 = vsub.f32 %v607, %v777
    %v834 = vsub.f32 %v610, %v781
    %v835 = vsub.f32 %v613, %v785
    %v836 = vsub.f32 %v616, %v789
    %v837 = vsub.f32 %v619, %v793
    %v838 = vsub.f32 %v622, %v797
    %v839 = vsub.f32 %v625, %v801
    %v840 = vsub.f32 %v628, %v805
    %v841 = vsub.f32 %v631, %v809
    %v842 = vmul.f32 %v826, 1.442695
    %v843 = vpow.pop %v842
    %v844 = vmul.f32 %v827, 1.442695
    %v845 = vpow.pop %v844
    %v846 = vmul.f32 %v828, 1.442695
    %v847 = vpow.pop %v846
    %v848 = vmul.f32 %v829, 1.442695
    %v849 = vpow.pop %v848
    %v850 = vmul.f32 %v830, 1.442695
    %v851 = vpow.pop %v850
    %v852 = vmul.f32 %v831, 1.442695
    %v853 = vpow.pop %v852
    %v854 = vmul.f32 %v832, 1.442695
    %v855 = vpow.pop %v854
    %v856 = vmul.f32 %v833, 1.442695
    %v857 = vpow.pop %v856
    %v858 = vmul.f32 %v834, 1.442695
    %v859 = vpow.pop %v858
    %v860 = vmul.f32 %v835, 1.442695
    %v861 = vpow.pop %v860
    %v862 = vmul.f32 %v836, 1.442695
    %v863 = vpow.pop %v862
    %v864 = vmul.f32 %v837, 1.442695
    %v865 = vpow.pop %v864
    %v866 = vmul.f32 %v838, 1.442695
    %v867 = vpow.pop %v866
    %v868 = vmul.f32 %v839, 1.442695
    %v869 = vpow.pop %v868
    %v870 = vmul.f32 %v840, 1.442695
    %v871 = vpow.pop %v870
    %v872 = vmul.f32 %v841, 1.442695
    %v873 = vpow.pop %v872
    %890 = vset.pattern.permute.xlu0 0
    %891 = vperm.xlu0 %890, %v843
    %v892 = vpop.permute.xlu0 %891
    %893 = vset.pattern.permute.xlu0 0
    %894 = vperm.xlu0 %893, %v845
    %v895 = vpop.permute.xlu0 %894
    %896 = vset.pattern.permute.xlu0 0
    %897 = vperm.xlu0 %896, %v847
    %v898 = vpop.permute.xlu0 %897
    %899 = vset.pattern.permute.xlu0 0
    %900 = vperm.xlu0 %899, %v849
    %v901 = vpop.permute.xlu0 %900
    %902 = vset.pattern.permute.xlu0 0
    %903 = vperm.xlu0 %902, %v851
    %v904 = vpop.permute.xlu0 %903
    %905 = vset.pattern.permute.xlu0 0
    %906 = vperm.xlu0 %905, %v853
    %v907 = vpop.permute.xlu0 %906
    %908 = vset.pattern.permute.xlu0 0
    %909 = vperm.xlu0 %908, %v855
    %v910 = vpop.permute.xlu0 %909
    %911 = vset.pattern.permute.xlu0 0
    %912 = vperm.xlu0 %911, %v857
    %v913 = vpop.permute.xlu0 %912
    %914 = vset.pattern.permute.xlu0 0
    %915 = vperm.xlu0 %914, %v859
    %v916 = vpop.permute.xlu0 %915
    %917 = vset.pattern.permute.xlu0 0
    %918 = vperm.xlu0 %917, %v861
    %v919 = vpop.permute.xlu0 %918
    %920 = vset.pattern.permute.xlu0 0
    %921 = vperm.xlu0 %920, %v863
    %v922 = vpop.permute.xlu0 %921
    %923 = vset.pattern.permute.xlu0 0
    %924 = vperm.xlu0 %923, %v865
    %v925 = vpop.permute.xlu0 %924
    %926 = vset.pattern.permute.xlu0 0
    %927 = vperm.xlu0 %926, %v867
    %v928 = vpop.permute.xlu0 %927
    %929 = vset.pattern.permute.xlu0 0
    %930 = vperm.xlu0 %929, %v869
    %v931 = vpop.permute.xlu0 %930
    %932 = vset.pattern.permute.xlu0 0
    %933 = vperm.xlu0 %932, %v871
    %v934 = vpop.permute.xlu0 %933
    %935 = vset.pattern.permute.xlu0 0
    %936 = vperm.xlu0 %935, %v873
    %v937 = vpop.permute.xlu0 %936
    %v938 = vlaneseq
    %v939 = vshrl.u32 %v938, 7
    %v940 = vsub.s32 %v649, %v939
    %v941 = vrot.slane %v892, %v940
    %v942 = vlaneseq
    %v943 = vshrl.u32 %v942, 7
    %v944 = vsub.s32 %v649, %v943
    %v945 = vrot.slane %v895, %v944
    %v946 = vlaneseq
    %v947 = vshrl.u32 %v946, 7
    %v948 = vsub.s32 %v649, %v947
    %v949 = vrot.slane %v898, %v948
    %v950 = vlaneseq
    %v951 = vshrl.u32 %v950, 7
    %v952 = vsub.s32 %v649, %v951
    %v953 = vrot.slane %v901, %v952
    %v954 = vlaneseq
    %v955 = vshrl.u32 %v954, 7
    %v956 = vsub.s32 %v649, %v955
    %v957 = vrot.slane %v904, %v956
    %v958 = vlaneseq
    %v959 = vshrl.u32 %v958, 7
    %v960 = vsub.s32 %v649, %v959
    %v961 = vrot.slane %v907, %v960
    %v962 = vlaneseq
    %v963 = vshrl.u32 %v962, 7
    %v964 = vsub.s32 %v649, %v963
    %v965 = vrot.slane %v910, %v964
    %v966 = vlaneseq
    %v967 = vshrl.u32 %v966, 7
    %v968 = vsub.s32 %v649, %v967
    %v969 = vrot.slane %v913, %v968
    %v970 = vlaneseq
    %v971 = vshrl.u32 %v970, 7
    %v972 = vsub.s32 %v649, %v971
    %v973 = vrot.slane %v916, %v972
    %v974 = vlaneseq
    %v975 = vshrl.u32 %v974, 7
    %v976 = vsub.s32 %v649, %v975
    %v977 = vrot.slane %v919, %v976
    %v978 = vlaneseq
    %v979 = vshrl.u32 %v978, 7
    %v980 = vsub.s32 %v649, %v979
    %v981 = vrot.slane %v922, %v980
    %v982 = vlaneseq
    %v983 = vshrl.u32 %v982, 7
    %v984 = vsub.s32 %v649, %v983
    %v985 = vrot.slane %v925, %v984
    %v986 = vlaneseq
    %v987 = vshrl.u32 %v986, 7
    %v988 = vsub.s32 %v649, %v987
    %v989 = vrot.slane %v928, %v988
    %v990 = vlaneseq
    %v991 = vshrl.u32 %v990, 7
    %v992 = vsub.s32 %v649, %v991
    %v993 = vrot.slane %v931, %v992
    %v994 = vlaneseq
    %v995 = vshrl.u32 %v994, 7
    %v996 = vsub.s32 %v649, %v995
    %v997 = vrot.slane %v934, %v996
    %v998 = vlaneseq
    %v999 = vshrl.u32 %v998, 7
    %v1000 = vsub.s32 %v649, %v999
    %v1001 = vrot.slane %v937, %v1000
    %v1002 = vsel %vm714, %v945, %v941
    %v1003 = vsel %vm716, %v949, %v1002
    %v1004 = vsel %vm718, %v953, %v1003
    %v1005 = vsel %vm720, %v957, %v1004
    %v1006 = vsel %vm722, %v961, %v1005
    %v1007 = vsel %vm724, %v965, %v1006
    %v1008 = vsel %vm726, %v969, %v1007
    %v1009 = vsel %vm714, %v977, %v973
    %v1010 = vsel %vm716, %v981, %v1009
    %v1011 = vsel %vm718, %v985, %v1010
    %v1012 = vsel %vm720, %v989, %v1011
    %v1013 = vsel %vm722, %v993, %v1012
    %v1014 = vsel %vm724, %v997, %v1013
    %v1015 = vsel %vm726, %v1001, %v1014
    %v1018 = vsel %vm737, %v1008, 0.0
    %1019 = vadd.xlane.f32.xlu0 %v1018
    %v1020 = vpop.xlane.xlu0 %1019
    %v1021 = vsel %vm737, %v1015, 0.0
    %1022 = vadd.xlane.f32.xlu0 %v1021
    %v1023 = vpop.xlane.xlu0 %1022
    %v1026 = vlaneseq
    %v1027 = vshrl.u32 %v1026, 7
    %v1028 = vsub.s32 0, %v1027
    %v1029 = vrot.slane %v1020, %v1028
    %v1030 = vlaneseq
    %v1031 = vshrl.u32 %v1030, 7
    %v1032 = vsub.s32 1, %v1031
    %v1033 = vrot.slane %v1020, %v1032
    %v1034 = vlaneseq
    %v1035 = vshrl.u32 %v1034, 7
    %v1036 = vsub.s32 2, %v1035
    %v1037 = vrot.slane %v1020, %v1036
    %v1038 = vlaneseq
    %v1039 = vshrl.u32 %v1038, 7
    %v1040 = vsub.s32 3, %v1039
    %v1041 = vrot.slane %v1020, %v1040
    %v1042 = vlaneseq
    %v1043 = vshrl.u32 %v1042, 7
    %v1044 = vsub.s32 4, %v1043
    %v1045 = vrot.slane %v1020, %v1044
    %v1046 = vlaneseq
    %v1047 = vshrl.u32 %v1046, 7
    %v1048 = vsub.s32 5, %v1047
    %v1049 = vrot.slane %v1020, %v1048
    %v1050 = vlaneseq
    %v1051 = vshrl.u32 %v1050, 7
    %v1052 = vsub.s32 6, %v1051
    %v1053 = vrot.slane %v1020, %v1052
    %v1054 = vlaneseq
    %v1055 = vshrl.u32 %v1054, 7
    %v1056 = vsub.s32 7, %v1055
    %v1057 = vrot.slane %v1020, %v1056
    %v1058 = vlaneseq
    %v1059 = vshrl.u32 %v1058, 7
    %v1060 = vsub.s32 0, %v1059
    %v1061 = vrot.slane %v1023, %v1060
    %v1062 = vlaneseq
    %v1063 = vshrl.u32 %v1062, 7
    %v1064 = vsub.s32 1, %v1063
    %v1065 = vrot.slane %v1023, %v1064
    %v1066 = vlaneseq
    %v1067 = vshrl.u32 %v1066, 7
    %v1068 = vsub.s32 2, %v1067
    %v1069 = vrot.slane %v1023, %v1068
    %v1070 = vlaneseq
    %v1071 = vshrl.u32 %v1070, 7
    %v1072 = vsub.s32 3, %v1071
    %v1073 = vrot.slane %v1023, %v1072
    %v1074 = vlaneseq
    %v1075 = vshrl.u32 %v1074, 7
    %v1076 = vsub.s32 4, %v1075
    %v1077 = vrot.slane %v1023, %v1076
    %v1078 = vlaneseq
    %v1079 = vshrl.u32 %v1078, 7
    %v1080 = vsub.s32 5, %v1079
    %v1081 = vrot.slane %v1023, %v1080
    %v1082 = vlaneseq
    %v1083 = vshrl.u32 %v1082, 7
    %v1084 = vsub.s32 6, %v1083
    %v1085 = vrot.slane %v1023, %v1084
    %v1086 = vlaneseq
    %v1087 = vshrl.u32 %v1086, 7
    %v1088 = vsub.s32 7, %v1087
    %v1089 = vrot.slane %v1023, %v1088
    %v1106 = vrcp.pop %v1029
    %v1107 = vmul.f32 %v843, %v1106
    %v1108 = vrcp.pop %v1033
    %v1109 = vmul.f32 %v845, %v1108
    %v1110 = vrcp.pop %v1037
    %v1111 = vmul.f32 %v847, %v1110
    %v1112 = vrcp.pop %v1041
    %v1113 = vmul.f32 %v849, %v1112
    %v1114 = vrcp.pop %v1045
    %v1115 = vmul.f32 %v851, %v1114
    %v1116 = vrcp.pop %v1049
    %v1117 = vmul.f32 %v853, %v1116
    %v1118 = vrcp.pop %v1053
    %v1119 = vmul.f32 %v855, %v1118
    %v1120 = vrcp.pop %v1057
    %v1121 = vmul.f32 %v857, %v1120
    %v1122 = vrcp.pop %v1061
    %v1123 = vmul.f32 %v859, %v1122
    %v1124 = vrcp.pop %v1065
    %v1125 = vmul.f32 %v861, %v1124
    %v1126 = vrcp.pop %v1069
    %v1127 = vmul.f32 %v863, %v1126
    %v1128 = vrcp.pop %v1073
    %v1129 = vmul.f32 %v865, %v1128
    %v1130 = vrcp.pop %v1077
    %v1131 = vmul.f32 %v867, %v1130
    %v1132 = vrcp.pop %v1081
    %v1133 = vmul.f32 %v869, %v1132
    %v1134 = vrcp.pop %v1085
    %v1135 = vmul.f32 %v871, %v1134
    %v1136 = vrcp.pop %v1089
    %v1137 = vmul.f32 %v873, %v1136
    %1139 = vset.pattern.permute.xlu0 0
    %1140 = vperm.xlu0 %1139, %v1107
    %v1141 = vpop.permute.xlu0 %1140
    %1144 = vset.pattern.permute.xlu0 0
    %1145 = vperm.xlu0 %1144, %v1109
    %v1146 = vpop.permute.xlu0 %1145
    %1149 = vset.pattern.permute.xlu0 0
    %1150 = vperm.xlu0 %1149, %v1111
    %v1151 = vpop.permute.xlu0 %1150
    %1154 = vset.pattern.permute.xlu0 0
    %1155 = vperm.xlu0 %1154, %v1113
    %v1156 = vpop.permute.xlu0 %1155
    %1159 = vset.pattern.permute.xlu0 0
    %1160 = vperm.xlu0 %1159, %v1115
    %v1161 = vpop.permute.xlu0 %1160
    %1164 = vset.pattern.permute.xlu0 0
    %1165 = vperm.xlu0 %1164, %v1117
    %v1166 = vpop.permute.xlu0 %1165
    %1169 = vset.pattern.permute.xlu0 0
    %1170 = vperm.xlu0 %1169, %v1119
    %v1171 = vpop.permute.xlu0 %1170
    %1174 = vset.pattern.permute.xlu0 0
    %1175 = vperm.xlu0 %1174, %v1121
    %v1176 = vpop.permute.xlu0 %1175
    %1179 = vset.pattern.permute.xlu0 0
    %1180 = vperm.xlu0 %1179, %v1123
    %v1181 = vpop.permute.xlu0 %1180
    %1184 = vset.pattern.permute.xlu0 0
    %1185 = vperm.xlu0 %1184, %v1125
    %v1186 = vpop.permute.xlu0 %1185
    %1189 = vset.pattern.permute.xlu0 0
    %1190 = vperm.xlu0 %1189, %v1127
    %v1191 = vpop.permute.xlu0 %1190
    %1194 = vset.pattern.permute.xlu0 0
    %1195 = vperm.xlu0 %1194, %v1129
    %v1196 = vpop.permute.xlu0 %1195
    %1199 = vset.pattern.permute.xlu0 0
    %1200 = vperm.xlu0 %1199, %v1131
    %v1201 = vpop.permute.xlu0 %1200
    %1204 = vset.pattern.permute.xlu0 0
    %1205 = vperm.xlu0 %1204, %v1133
    %v1206 = vpop.permute.xlu0 %1205
    %1209 = vset.pattern.permute.xlu0 0
    %1210 = vperm.xlu0 %1209, %v1135
    %v1211 = vpop.permute.xlu0 %1210
    %1214 = vset.pattern.permute.xlu0 0
    %1215 = vperm.xlu0 %1214, %v1137
    %v1216 = vpop.permute.xlu0 %1215
    %v1218 = vmul.f32 %v40, %v1141
    %v1219 = vmul.f32 %v41, %v1146
    %v1220 = vmul.f32 %v42, %v1151
    %v1221 = vmul.f32 %v43, %v1156
    %v1222 = vmul.f32 %v44, %v1161
    %v1223 = vmul.f32 %v45, %v1166
    %v1224 = vmul.f32 %v46, %v1171
    %v1225 = vmul.f32 %v47, %v1176
    %v1226 = vmul.f32 %v48, %v1181
    %v1227 = vmul.f32 %v49, %v1186
    %v1228 = vmul.f32 %v50, %v1191
    %v1229 = vmul.f32 %v51, %v1196
    %v1230 = vmul.f32 %v52, %v1201
    %v1231 = vmul.f32 %v53, %v1206
    %v1232 = vmul.f32 %v54, %v1211
    %v1233 = vmul.f32 %v55, %v1216
    %v1234 = vsel %vm66, %v1218, 0.0
    %v1235 = vrot.slane %v1234, 4
    %v1236 = vadd.f32 %v1234, %v1235
    %v1237 = vrot.slane %v1236, 2
    %v1238 = vadd.f32 %v1236, %v1237
    %v1239 = vrot.slane %v1238, 1
    %v1240 = vadd.f32 %v1238, %v1239
    %v1241 = vsel %vm66, %v1219, 0.0
    %v1242 = vrot.slane %v1241, 4
    %v1243 = vadd.f32 %v1241, %v1242
    %v1244 = vrot.slane %v1243, 2
    %v1245 = vadd.f32 %v1243, %v1244
    %v1246 = vrot.slane %v1245, 1
    %v1247 = vadd.f32 %v1245, %v1246
    %v1248 = vsel %vm66, %v1220, 0.0
    %v1249 = vrot.slane %v1248, 4
    %v1250 = vadd.f32 %v1248, %v1249
    %v1251 = vrot.slane %v1250, 2
    %v1252 = vadd.f32 %v1250, %v1251
    %v1253 = vrot.slane %v1252, 1
    %v1254 = vadd.f32 %v1252, %v1253
    %v1255 = vsel %vm66, %v1221, 0.0
    %v1256 = vrot.slane %v1255, 4
    %v1257 = vadd.f32 %v1255, %v1256
    %v1258 = vrot.slane %v1257, 2
    %v1259 = vadd.f32 %v1257, %v1258
    %v1260 = vrot.slane %v1259, 1
    %v1261 = vadd.f32 %v1259, %v1260
    %v1262 = vsel %vm66, %v1222, 0.0
    %v1263 = vrot.slane %v1262, 4
    %v1264 = vadd.f32 %v1262, %v1263
    %v1265 = vrot.slane %v1264, 2
    %v1266 = vadd.f32 %v1264, %v1265
    %v1267 = vrot.slane %v1266, 1
    %v1268 = vadd.f32 %v1266, %v1267
    %v1269 = vsel %vm66, %v1223, 0.0
    %v1270 = vrot.slane %v1269, 4
    %v1271 = vadd.f32 %v1269, %v1270
    %v1272 = vrot.slane %v1271, 2
    %v1273 = vadd.f32 %v1271, %v1272
    %v1274 = vrot.slane %v1273, 1
    %v1275 = vadd.f32 %v1273, %v1274
    %v1276 = vsel %vm66, %v1224, 0.0
    %v1277 = vrot.slane %v1276, 4
    %v1278 = vadd.f32 %v1276, %v1277
    %v1279 = vrot.slane %v1278, 2
    %v1280 = vadd.f32 %v1278, %v1279
    %v1281 = vrot.slane %v1280, 1
    %v1282 = vadd.f32 %v1280, %v1281
    %v1283 = vsel %vm66, %v1225, 0.0
    %v1284 = vrot.slane %v1283, 4
    %v1285 = vadd.f32 %v1283, %v1284
    %v1286 = vrot.slane %v1285, 2
    %v1287 = vadd.f32 %v1285, %v1286
    %v1288 = vrot.slane %v1287, 1
    %v1289 = vadd.f32 %v1287, %v1288
    %v1290 = vsel %vm66, %v1226, 0.0
    %v1291 = vrot.slane %v1290, 4
    %v1292 = vadd.f32 %v1290, %v1291
    %v1293 = vrot.slane %v1292, 2
    %v1294 = vadd.f32 %v1292, %v1293
    %v1295 = vrot.slane %v1294, 1
    %v1296 = vadd.f32 %v1294, %v1295
    %v1297 = vsel %vm66, %v1227, 0.0
    %v1298 = vrot.slane %v1297, 4
    %v1299 = vadd.f32 %v1297, %v1298
    %v1300 = vrot.slane %v1299, 2
    %v1301 = vadd.f32 %v1299, %v1300
    %v1302 = vrot.slane %v1301, 1
    %v1303 = vadd.f32 %v1301, %v1302
    %v1304 = vsel %vm66, %v1228, 0.0
    %v1305 = vrot.slane %v1304, 4
    %v1306 = vadd.f32 %v1304, %v1305
    %v1307 = vrot.slane %v1306, 2
    %v1308 = vadd.f32 %v1306, %v1307
    %v1309 = vrot.slane %v1308, 1
    %v1310 = vadd.f32 %v1308, %v1309
    %v1311 = vsel %vm66, %v1229, 0.0
    %v1312 = vrot.slane %v1311, 4
    %v1313 = vadd.f32 %v1311, %v1312
    %v1314 = vrot.slane %v1313, 2
    %v1315 = vadd.f32 %v1313, %v1314
    %v1316 = vrot.slane %v1315, 1
    %v1317 = vadd.f32 %v1315, %v1316
    %v1318 = vsel %vm66, %v1230, 0.0
    %v1319 = vrot.slane %v1318, 4
    %v1320 = vadd.f32 %v1318, %v1319
    %v1321 = vrot.slane %v1320, 2
    %v1322 = vadd.f32 %v1320, %v1321
    %v1323 = vrot.slane %v1322, 1
    %v1324 = vadd.f32 %v1322, %v1323
    %v1325 = vsel %vm66, %v1231, 0.0
    %v1326 = vrot.slane %v1325, 4
    %v1327 = vadd.f32 %v1325, %v1326
    %v1328 = vrot.slane %v1327, 2
    %v1329 = vadd.f32 %v1327, %v1328
    %v1330 = vrot.slane %v1329, 1
    %v1331 = vadd.f32 %v1329, %v1330
    %v1332 = vsel %vm66, %v1232, 0.0
    %v1333 = vrot.slane %v1332, 4
    %v1334 = vadd.f32 %v1332, %v1333
    %v1335 = vrot.slane %v1334, 2
    %v1336 = vadd.f32 %v1334, %v1335
    %v1337 = vrot.slane %v1336, 1
    %v1338 = vadd.f32 %v1336, %v1337
    %v1339 = vsel %vm66, %v1233, 0.0
    %v1340 = vrot.slane %v1339, 4
    %v1341 = vadd.f32 %v1339, %v1340
    %v1342 = vrot.slane %v1341, 2
    %v1343 = vadd.f32 %v1341, %v1342
    %v1344 = vrot.slane %v1343, 1
    %v1345 = vadd.f32 %v1343, %v1344
    %v1362 = vsel %vm714, %v1247, %v1240
    %v1363 = vsel %vm716, %v1254, %v1362
    %v1364 = vsel %vm718, %v1261, %v1363
    %v1365 = vsel %vm720, %v1268, %v1364
    %v1366 = vsel %vm722, %v1275, %v1365
    %v1367 = vsel %vm724, %v1282, %v1366
    %v1368 = vsel %vm726, %v1289, %v1367
    %v1369 = vsel %vm714, %v1303, %v1296
    %v1370 = vsel %vm716, %v1310, %v1369
    %v1371 = vsel %vm718, %v1317, %v1370
    %v1372 = vsel %vm720, %v1324, %v1371
    %v1373 = vsel %vm722, %v1331, %v1372
    %v1374 = vsel %vm724, %v1338, %v1373
    %v1375 = vsel %vm726, %v1345, %v1374
    %1378 = vst.msk [vmem:[#allocation5] sm:$0xff] %vm66, %v1368
    %1379 = vst.msk [vmem:[#allocation5 + $0x8] sm:$0xff] %vm66, %v1375
    %v1380 = vlaneseq
    %v1381 = vshrl.u32 %v1380, 7
    %v1382 = vsub.s32 %v649, %v1381
    %v1383 = vrot.slane %v1141, %v1382
    %v1384 = vlaneseq
    %v1385 = vshrl.u32 %v1384, 7
    %v1386 = vsub.s32 %v649, %v1385
    %v1387 = vrot.slane %v1146, %v1386
    %v1388 = vlaneseq
    %v1389 = vshrl.u32 %v1388, 7
    %v1390 = vsub.s32 %v649, %v1389
    %v1391 = vrot.slane %v1151, %v1390
    %v1392 = vlaneseq
    %v1393 = vshrl.u32 %v1392, 7
    %v1394 = vsub.s32 %v649, %v1393
    %v1395 = vrot.slane %v1156, %v1394
    %v1396 = vlaneseq
    %v1397 = vshrl.u32 %v1396, 7
    %v1398 = vsub.s32 %v649, %v1397
    %v1399 = vrot.slane %v1161, %v1398
    %v1400 = vlaneseq
    %v1401 = vshrl.u32 %v1400, 7
    %v1402 = vsub.s32 %v649, %v1401
    %v1403 = vrot.slane %v1166, %v1402
    %v1404 = vlaneseq
    %v1405 = vshrl.u32 %v1404, 7
    %v1406 = vsub.s32 %v649, %v1405
    %v1407 = vrot.slane %v1171, %v1406
    %v1408 = vlaneseq
    %v1409 = vshrl.u32 %v1408, 7
    %v1410 = vsub.s32 %v649, %v1409
    %v1411 = vrot.slane %v1176, %v1410
    %v1412 = vlaneseq
    %v1413 = vshrl.u32 %v1412, 7
    %v1414 = vsub.s32 %v649, %v1413
    %v1415 = vrot.slane %v1181, %v1414
    %v1416 = vlaneseq
    %v1417 = vshrl.u32 %v1416, 7
    %v1418 = vsub.s32 %v649, %v1417
    %v1419 = vrot.slane %v1186, %v1418
    %v1420 = vlaneseq
    %v1421 = vshrl.u32 %v1420, 7
    %v1422 = vsub.s32 %v649, %v1421
    %v1423 = vrot.slane %v1191, %v1422
    %v1424 = vlaneseq
    %v1425 = vshrl.u32 %v1424, 7
    %v1426 = vsub.s32 %v649, %v1425
    %v1427 = vrot.slane %v1196, %v1426
    %v1428 = vlaneseq
    %v1429 = vshrl.u32 %v1428, 7
    %v1430 = vsub.s32 %v649, %v1429
    %v1431 = vrot.slane %v1201, %v1430
    %v1432 = vlaneseq
    %v1433 = vshrl.u32 %v1432, 7
    %v1434 = vsub.s32 %v649, %v1433
    %v1435 = vrot.slane %v1206, %v1434
    %v1436 = vlaneseq
    %v1437 = vshrl.u32 %v1436, 7
    %v1438 = vsub.s32 %v649, %v1437
    %v1439 = vrot.slane %v1211, %v1438
    %v1440 = vlaneseq
    %v1441 = vshrl.u32 %v1440, 7
    %v1442 = vsub.s32 %v649, %v1441
    %v1443 = vrot.slane %v1216, %v1442
    %v1444 = vsel %vm714, %v1387, %v1383
    %v1445 = vsel %vm716, %v1391, %v1444
    %v1446 = vsel %vm718, %v1395, %v1445
    %v1447 = vsel %vm720, %v1399, %v1446
    %v1448 = vsel %vm722, %v1403, %v1447
    %v1449 = vsel %vm724, %v1407, %v1448
    %v1450 = vsel %vm726, %v1411, %v1449
    %v1451 = vsel %vm714, %v1419, %v1415
    %v1452 = vsel %vm716, %v1423, %v1451
    %v1453 = vsel %vm718, %v1427, %v1452
    %v1454 = vsel %vm720, %v1431, %v1453
    %v1455 = vsel %vm722, %v1435, %v1454
    %v1456 = vsel %vm724, %v1439, %v1455
    %v1457 = vsel %vm726, %v1443, %v1456
    %1460 = vst.msk [vmem:[%s7] sm:$0xff] %vm737, %v1450
    %1461 = vst.msk [vmem:[%s7 + $0x8] sm:$0xff] %vm737, %v1457
    // Predicated region
    $region30: #{tpu_custom_call.1} parent=1 // pred_check
      _
    $region31: #{tpu_custom_call.1} parent=1 // pred_check_branch
      %1463 = sbr.rel (0) target = $region33
    $region32: #{tpu_custom_call.1} parent=1 // pred_region
      %s1465 = ssub.s32 256, 256
      %1466 = vsyncadd [#allocation4], %s1465
      %s1467 = sshll.u32 [#allocation5], 4
      %s1468 = int_to_ptr.vmem [resolvable:$true] %s1467
      %1473 = dma.vmem_to_hbm [thread:$0]  %s1468, 256, %s6, [#allocation4], 128, 128, 8
    $region33: #{tpu_custom_call.1} parent=1 // pred_fallthru
      _
    // Predicated region
    $region34: #{tpu_custom_call.1} parent=1 // pred_check
      _
    $region35: #{tpu_custom_call.1} parent=1 // pred_check_branch
      %1475 = sbr.rel (0) target = $region37
    $region36: #{tpu_custom_call.1} parent=1 // pred_region
      _
    $region37: #{tpu_custom_call.1} parent=1 // pred_fallthru
      _
    // Predicated region
    $region38: #{tpu_custom_call.1} parent=1 // pred_check
      _
    $region39: #{tpu_custom_call.1} parent=1 // pred_check_branch
      %1477 = sbr.rel (0) target = $region41
    $region40: #{tpu_custom_call.1} parent=1 // pred_region
      %1478 = dma.done [#allocation4], 256
    $region41: #{tpu_custom_call.1} parent=1 // pred_fallthru
      _
    // Predicated region
    $region42: #{tpu_custom_call.1} parent=1 // pred_check
      _
    $region43: #{tpu_custom_call.1} parent=1 // pred_check_branch
      %1480 = sbr.rel (0) target = $region45
    $region44: #{tpu_custom_call.1} parent=1 // pred_region
      _
    $region45: #{tpu_custom_call.1} parent=1 // pred_fallthru
      _
    %1481 = vsyncpa [#allocation3], 1
    %1482 = vsyncpa [#allocation4], 1

// kernel: tpu_custom_call.1
$region0: #{tpu_custom_call.1}
  #allocation0 [shape = 'u32[]', space=smem, size = 0x4, offset = 0x4, fixed_abs, tag = 'smem constant byte address 0x4 - core index']
  #allocation1 [shape = 'u32[144,128]{1,0:T(1,128)}', space=vmem, size = 0x12000, scoped, tag = 'internal scratch']
  %s0 = inlined_call_operand.hbm [shape: f32[16,8,32], index: 0, kind: input, shape index: {}]
  %s1 = inlined_call_operand.vmem [shape: f32[16,32], index: 1, kind: input, shape index: {}]
  %s2 = inlined_call_operand.vmem [shape: f32[32,16], index: 2, kind: input, shape index: {}]
  %s3 = inlined_call_operand.vmem [shape: f32[32,16], index: 3, kind: input, shape index: {}]
  %s4 = inlined_call_operand.vmem [shape: f32[1,16], index: 4, kind: input, shape index: {}]
  %s5 = inlined_call_operand.vmem [shape: f32[1,16], index: 5, kind: input, shape index: {}]
  %s6 = inlined_call_operand.hbm [shape: f32[16,32], index: 6, kind: output, shape index: {0}]
  %s7 = inlined_call_operand.vmem [shape: f32[16,8], index: 7, kind: output, shape index: {1}]
  %8 = xla_tuple %s6, %s7
  %s9 = sld [smem:[#allocation0]]
  $region46: #{tpu_custom_call.1} parent=0
    _
  %s11 = ssub.s32 1, %s9
  %s12 = scalar_select 0, %s11, %s9
  $region1: #{tpu_custom_call.1} parent=0
    #allocation2 [shape = 'u8[65536]{0}', space=vmem, size = 0x10000, scoped, tag = 'input window, operand 0, single buffered']
    #allocation3 [shape = 's32[1]{0}', space=sflag, size = 0x4, scoped, tag = 'scoped memory for tpu_custom_call.1']
    #allocation4 [shape = 's32[1]{0}', space=sflag, size = 0x4, scoped, tag = 'scoped memory for tpu_custom_call.1']
    #allocation5 [shape = 'u8[8192]{0}', space=vmem, size = 0x2000, scoped, tag = 'output window, operand 0, single buffered']
    %13 = vsyncpa [#allocation3], 0
    %14 = vsyncpa [#allocation4], 0
    // Predicated region
    $region2: #{tpu_custom_call.1} parent=1 // pred_check
      _
    $region3: #{tpu_custom_call.1} parent=1 // pred_check_branch
      %16 = sbr.rel (0) target = $region5
    $region4: #{tpu_custom_call.1} parent=1 // pred_region
      %s18 = ssub.s32 2048, 2048
      %19 = vsyncadd [#allocation3], %s18
      %s20 = sshll.u32 [#allocation2], 4
      %s21 = int_to_ptr.vmem [resolvable:$true] %s20
      %26 = dma.hbm_to_vmem [thread:$0]  %s0, 2048, %s21, [#allocation3], 128, 128, 8
    $region5: #{tpu_custom_call.1} parent=1 // pred_fallthru
      _
    // Predicated region
    $region6: #{tpu_custom_call.1} parent=1 // pred_check
      _
    $region7: #{tpu_custom_call.1} parent=1 // pred_check_branch
      %28 = sbr.rel (0) target = $region9
    $region8: #{tpu_custom_call.1} parent=1 // pred_region
      _
    $region9: #{tpu_custom_call.1} parent=1 // pred_fallthru
      _
    // Predicated region
    $region10: #{tpu_custom_call.1} parent=1 // pred_check
      _
    $region11: #{tpu_custom_call.1} parent=1 // pred_check_branch
      %30 = sbr.rel (0) target = $region13
    $region12: #{tpu_custom_call.1} parent=1 // pred_region
      _
    $region13: #{tpu_custom_call.1} parent=1 // pred_fallthru
      _
    // Predicated region
    $region14: #{tpu_custom_call.1} parent=1 // pred_check
      _
    $region15: #{tpu_custom_call.1} parent=1 // pred_check_branch
      %32 = sbr.rel (0) target = $region17
    $region16: #{tpu_custom_call.1} parent=1 // pred_region
      _
    $region17: #{tpu_custom_call.1} parent=1 // pred_fallthru
      _
    // Predicated region
    $region18: #{tpu_custom_call.1} parent=1 // pred_check
      _
    $region19: #{tpu_custom_call.1} parent=1 // pred_check_branch
      %34 = sbr.rel (0) target = $region21
    $region20: #{tpu_custom_call.1} parent=1 // pred_region
      _
    $region21: #{tpu_custom_call.1} parent=1 // pred_fallthru
      _
    // Predicated region
    $region22: #{tpu_custom_call.1} parent=1 // pred_check
      _
    $region23: #{tpu_custom_call.1} parent=1 // pred_check_branch
      %36 = sbr.rel (0) target = $region25
    $region24: #{tpu_custom_call.1} parent=1 // pred_region
      _
    $region25: #{tpu_custom_call.1} parent=1 // pred_fallthru
      _
    // Predicated region
    $region26: #{tpu_custom_call.1} parent=1 // pred_check
      _
    $region27: #{tpu_custom_call.1} parent=1 // pred_check_branch
      %38 = sbr.rel (0) target = $region29
    $region28: #{tpu_custom_call.1} parent=1 // pred_region
      %39 = dma.done [#allocation3], 2048
    $region29: #{tpu_custom_call.1} parent=1 // pred_fallthru
      _
    %v40 = vld [vmem:[#allocation2] sm:$0xff]
    %v41 = vld [vmem:[#allocation2 + $0x8] sm:$0xff]
    %v42 = vld [vmem:[#allocation2 + $0x10] sm:$0xff]
    %v43 = vld [vmem:[#allocation2 + $0x18] sm:$0xff]
    %v44 = vld [vmem:[#allocation2 + $0x20] sm:$0xff]
    %v45 = vld [vmem:[#allocation2 + $0x28] sm:$0xff]
    %v46 = vld [vmem:[#allocation2 + $0x30] sm:$0xff]
    %v47 = vld [vmem:[#allocation2 + $0x38] sm:$0xff]
    %v48 = vld [vmem:[#allocation2 + $0x40] sm:$0xff]
    %v49 = vld [vmem:[#allocation2 + $0x48] sm:$0xff]
    %v50 = vld [vmem:[#allocation2 + $0x50] sm:$0xff]
    %v51 = vld [vmem:[#allocation2 + $0x58] sm:$0xff]
    %v52 = vld [vmem:[#allocation2 + $0x60] sm:$0xff]
    %v53 = vld [vmem:[#allocation2 + $0x68] sm:$0xff]
    %v54 = vld [vmem:[#allocation2 + $0x70] sm:$0xff]
    %v55 = vld [vmem:[#allocation2 + $0x78] sm:$0xff]
    %v56 = vld [vmem:[%s2] sm:$0xff]
    %v57 = vld [vmem:[%s2 + $0x8] sm:$0xff]
    %v58 = vld [vmem:[%s2 + $0x10] sm:$0xff]
    %v59 = vld [vmem:[%s2 + $0x18] sm:$0xff]
    %v60 = vld [vmem:[%s1] sm:$0xff]
    %v61 = vld [vmem:[%s1 + $0x8] sm:$0xff]
    %v62 = vld [vmem:[%s3] sm:$0xff]
    %v63 = vld [vmem:[%s3 + $0x8] sm:$0xff]
    %v64 = vld [vmem:[%s3 + $0x10] sm:$0xff]
    %v65 = vld [vmem:[%s3 + $0x18] sm:$0xff]
    %vm66 = vcmask 261120
    %v68 = vsel %vm66, %v60, 0
    %v71 = vsel %vm66, %v61, 0
    %73 = vmatprep.subr.mxu0 0.0
    %74 = vmatpush1.msra.mxu0 0.0
    %75 = vmatprep.subr.mxu0 0.0
    %76 = vmatpush1.msra.mxu0 0.0
    %77 = vmatprep.subr.mxu0 0.0
    %78 = vmatpush1.msra.mxu0 0.0
    %79 = vmatprep.subr.mxu0 0.0
    %80 = vmatpush1.msra.mxu0 0.0
    %81 = vmatprep.subr.mxu0 0.0
    %82 = vmatpush1.msra.mxu0 0.0
    %83 = vmatprep.subr.mxu0 0.0
    %84 = vmatpush1.msra.mxu0 0.0
    %85 = vmatprep.subr.mxu0 0.0
    %86 = vmatpush1.msra.mxu0 0.0
    %87 = vmatprep.subr.mxu0 0.0
    %88 = vmatpush1.msra.mxu0 0.0
    %89 = vmatprep.subr.mxu0 0.0
    %90 = vmatpush1.msra.mxu0 0.0
    %91 = vmatprep.subr.mxu0 0.0
    %92 = vmatpush1.msra.mxu0 0.0
    %93 = vmatprep.subr.mxu0 0.0
    %94 = vmatpush1.msra.mxu0 0.0
    %95 = vmatprep.subr.mxu0 0.0
    %96 = vmatpush1.msra.mxu0 0.0
    %97 = vmatprep.subr.mxu0 0.0
    %98 = vmatpush1.msra.mxu0 %v65
    %99 = vmatprep.subr.mxu0 0.0
    %100 = vmatpush1.msra.mxu0 %v64
    %101 = vmatprep.subr.mxu0 0.0
    %102 = vmatpush1.msra.mxu0 %v63
    %103 = vmatprep.subr.mxu0 0.0
    %104 = vmatpush1.msra.mxu0 %v62
    %105 = vmatprep.subr.mxu0 0.0
    %106 = vmatpush2.msra.mxu0 0.0
    %107 = vmatprep.subr.mxu0 0.0
    %108 = vmatpush2.msra.mxu0 0.0
    %109 = vmatprep.subr.mxu0 0.0
    %110 = vmatpush2.msra.mxu0 0.0
    %111 = vmatprep.subr.mxu0 0.0
    %112 = vmatpush2.msra.mxu0 0.0
    %113 = vmatprep.subr.mxu0 0.0
    %114 = vmatpush2.msra.mxu0 0.0
    %115 = vmatprep.subr.mxu0 0.0
    %116 = vmatpush2.msra.mxu0 0.0
    %117 = vmatprep.subr.mxu0 0.0
    %118 = vmatpush2.msra.mxu0 0.0
    %119 = vmatprep.subr.mxu0 0.0
    %120 = vmatpush2.msra.mxu0 0.0
    %121 = vmatprep.subr.mxu0 0.0
    %122 = vmatpush2.msra.mxu0 0.0
    %123 = vmatprep.subr.mxu0 0.0
    %124 = vmatpush2.msra.mxu0 0.0
    %125 = vmatprep.subr.mxu0 0.0
    %126 = vmatpush2.msra.mxu0 0.0
    %127 = vmatprep.subr.mxu0 0.0
    %128 = vmatpush2.msra.mxu0 0.0
    %129 = vmatprep.subr.mxu0 0.0
    %130 = vmatpush2.msra.mxu0 0.0
    %131 = vmatprep.subr.mxu0 0.0
    %132 = vmatpush2.msra.mxu0 0.0
    %133 = vmatprep.subr.mxu0 0.0
    %134 = vmatpush2.msra.mxu0 0.0
    %135 = vmatprep.subr.mxu0 0.0
    %136 = vmatpush2.msra.mxu0 0.0
    %137 = vmatprep.mubr.f32.mxu0 0.0
    %138 = vmatmul.mubr.f32.gmra.mxu0 %v68
    %v139 = vpop.f32.mrf.mxu0
    %v140 = vadd.f32 0.0, %v139
    %v141 = vpop.f32.mrf.mxu0
    %142 = vmatprep.mubr.f32.mxu0 0.0
    %143 = vmatmul.mubr.f32.gmra.mxu0 %v71
    %v144 = vpop.f32.mrf.mxu0
    %v145 = vadd.f32 0.0, %v144
    %v146 = vpop.f32.mrf.mxu0
    %147 = vdwg.mxu0
    %v150 = vcombine.high %v140, %v140
    %v152 = vunpack.c.l.s4 1966171168
    %v153 = vunpack.c.0.s8 %v152
    %v154 = vlaneseq
    %v155 = vshrl.u32 %v154, 7
    %v156 = vsub.s32 %v153, %v155
    %v157 = vrot.slane %v140, %v156
    %v159 = vunpack.c.l.s4 1966171168
    %v160 = vunpack.c.0.s8 %v159
    %v161 = vlaneseq
    %v162 = vshrl.u32 %v161, 7
    %v163 = vsub.s32 %v160, %v162
    %v164 = vrot.slane %v150, %v163
    %v165 = vcombine.high %v157, %v157
    %v166 = vcombine.high %v164, %v164
    %v168 = vunpack.c.l.s4 1966171168
    %v169 = vunpack.c.0.s8 %v168
    %v170 = vlaneseq
    %v171 = vshrl.u32 %v170, 7
    %v172 = vsub.s32 %v169, %v171
    %v173 = vrot.slane %v157, %v172
    %v175 = vunpack.c.l.s4 1966171168
    %v176 = vunpack.c.0.s8 %v175
    %v177 = vlaneseq
    %v178 = vshrl.u32 %v177, 7
    %v179 = vsub.s32 %v176, %v178
    %v180 = vrot.slane %v164, %v179
    %v182 = vunpack.c.l.s4 1966171168
    %v183 = vunpack.c.0.s8 %v182
    %v184 = vlaneseq
    %v185 = vshrl.u32 %v184, 7
    %v186 = vsub.s32 %v183, %v185
    %v187 = vrot.slane %v165, %v186
    %v189 = vunpack.c.l.s4 1966171168
    %v190 = vunpack.c.0.s8 %v189
    %v191 = vlaneseq
    %v192 = vshrl.u32 %v191, 7
    %v193 = vsub.s32 %v190, %v192
    %v194 = vrot.slane %v166, %v193
    %v195 = vcombine.high %v173, %v173
    %v196 = vcombine.high %v180, %v180
    %v197 = vcombine.high %v187, %v187
    %v198 = vcombine.high %v194, %v194
    %v199 = vcombine.high %v145, %v145
    %v201 = vunpack.c.l.s4 1966171168
    %v202 = vunpack.c.0.s8 %v201
    %v203 = vlaneseq
    %v204 = vshrl.u32 %v203, 7
    %v205 = vsub.s32 %v202, %v204
    %v206 = vrot.slane %v145, %v205
    %v208 = vunpack.c.l.s4 1966171168
    %v209 = vunpack.c.0.s8 %v208
    %v210 = vlaneseq
    %v211 = vshrl.u32 %v210, 7
    %v212 = vsub.s32 %v209, %v211
    %v213 = vrot.slane %v199, %v212
    %v214 = vcombine.high %v206, %v206
    %v215 = vcombine.high %v213, %v213
    %v217 = vunpack.c.l.s4 1966171168
    %v218 = vunpack.c.0.s8 %v217
    %v219 = vlaneseq
    %v220 = vshrl.u32 %v219, 7
    %v221 = vsub.s32 %v218, %v220
    %v222 = vrot.slane %v206, %v221
    %v224 = vunpack.c.l.s4 1966171168
    %v225 = vunpack.c.0.s8 %v224
    %v226 = vlaneseq
    %v227 = vshrl.u32 %v226, 7
    %v228 = vsub.s32 %v225, %v227
    %v229 = vrot.slane %v213, %v228
    %v231 = vunpack.c.l.s4 1966171168
    %v232 = vunpack.c.0.s8 %v231
    %v233 = vlaneseq
    %v234 = vshrl.u32 %v233, 7
    %v235 = vsub.s32 %v232, %v234
    %v236 = vrot.slane %v214, %v235
    %v238 = vunpack.c.l.s4 1966171168
    %v239 = vunpack.c.0.s8 %v238
    %v240 = vlaneseq
    %v241 = vshrl.u32 %v240, 7
    %v242 = vsub.s32 %v239, %v241
    %v243 = vrot.slane %v215, %v242
    %v244 = vcombine.high %v222, %v222
    %v245 = vcombine.high %v229, %v229
    %v246 = vcombine.high %v236, %v236
    %v247 = vcombine.high %v243, %v243
    %v248 = vlaneseq
    %v249 = vshrl.u32 %v248, 7
    %v250 = vsub.s32 0, %v249
    %v251 = vrot.slane %v173, %v250
    %v252 = vlaneseq
    %v253 = vshrl.u32 %v252, 7
    %v254 = vsub.s32 0, %v253
    %v255 = vrot.slane %v187, %v254
    %v256 = vlaneseq
    %v257 = vshrl.u32 %v256, 7
    %v258 = vsub.s32 0, %v257
    %v259 = vrot.slane %v195, %v258
    %v260 = vlaneseq
    %v261 = vshrl.u32 %v260, 7
    %v262 = vsub.s32 0, %v261
    %v263 = vrot.slane %v197, %v262
    %v264 = vlaneseq
    %v265 = vshrl.u32 %v264, 7
    %v266 = vsub.s32 0, %v265
    %v267 = vrot.slane %v180, %v266
    %v268 = vlaneseq
    %v269 = vshrl.u32 %v268, 7
    %v270 = vsub.s32 0, %v269
    %v271 = vrot.slane %v194, %v270
    %v272 = vlaneseq
    %v273 = vshrl.u32 %v272, 7
    %v274 = vsub.s32 0, %v273
    %v275 = vrot.slane %v196, %v274
    %v276 = vlaneseq
    %v277 = vshrl.u32 %v276, 7
    %v278 = vsub.s32 0, %v277
    %v279 = vrot.slane %v198, %v278
    %v280 = vlaneseq
    %v281 = vshrl.u32 %v280, 7
    %v282 = vsub.s32 0, %v281
    %v283 = vrot.slane %v222, %v282
    %v284 = vlaneseq
    %v285 = vshrl.u32 %v284, 7
    %v286 = vsub.s32 0, %v285
    %v287 = vrot.slane %v236, %v286
    %v288 = vlaneseq
    %v289 = vshrl.u32 %v288, 7
    %v290 = vsub.s32 0, %v289
    %v291 = vrot.slane %v244, %v290
    %v292 = vlaneseq
    %v293 = vshrl.u32 %v292, 7
    %v294 = vsub.s32 0, %v293
    %v295 = vrot.slane %v246, %v294
    %v296 = vlaneseq
    %v297 = vshrl.u32 %v296, 7
    %v298 = vsub.s32 0, %v297
    %v299 = vrot.slane %v229, %v298
    %v300 = vlaneseq
    %v301 = vshrl.u32 %v300, 7
    %v302 = vsub.s32 0, %v301
    %v303 = vrot.slane %v243, %v302
    %v304 = vlaneseq
    %v305 = vshrl.u32 %v304, 7
    %v306 = vsub.s32 0, %v305
    %v307 = vrot.slane %v245, %v306
    %v308 = vlaneseq
    %v309 = vshrl.u32 %v308, 7
    %v310 = vsub.s32 0, %v309
    %v311 = vrot.slane %v247, %v310
    %v329 = vsel %vm66, %v40, 0
    %v332 = vsel %vm66, %v41, 0
    %v335 = vsel %vm66, %v42, 0
    %v338 = vsel %vm66, %v43, 0
    %v341 = vsel %vm66, %v44, 0
    %v344 = vsel %vm66, %v45, 0
    %v347 = vsel %vm66, %v46, 0
    %v350 = vsel %vm66, %v47, 0
    %v353 = vsel %vm66, %v48, 0
    %v356 = vsel %vm66, %v49, 0
    %v359 = vsel %vm66, %v50, 0
    %v362 = vsel %vm66, %v51, 0
    %v365 = vsel %vm66, %v52, 0
    %v368 = vsel %vm66, %v53, 0
    %v371 = vsel %vm66, %v54, 0
    %v374 = vsel %vm66, %v55, 0
    %376 = vmatprep.subr.mxu0 0.0
    %377 = vmatpush1.msra.mxu0 0.0
    %378 = vmatprep.subr.mxu0 0.0
    %379 = vmatpush1.msra.mxu0 0.0
    %380 = vmatprep.subr.mxu0 0.0
    %381 = vmatpush1.msra.mxu0 0.0
    %382 = vmatprep.subr.mxu0 0.0
    %383 = vmatpush1.msra.mxu0 0.0
    %384 = vmatprep.subr.mxu0 0.0
    %385 = vmatpush1.msra.mxu0 0.0
    %386 = vmatprep.subr.mxu0 0.0
    %387 = vmatpush1.msra.mxu0 0.0
    %388 = vmatprep.subr.mxu0 0.0
    %389 = vmatpush1.msra.mxu0 0.0
    %390 = vmatprep.subr.mxu0 0.0
    %391 = vmatpush1.msra.mxu0 0.0
    %392 = vmatprep.subr.mxu0 0.0
    %393 = vmatpush1.msra.mxu0 0.0
    %394 = vmatprep.subr.mxu0 0.0
    %395 = vmatpush1.msra.mxu0 0.0
    %396 = vmatprep.subr.mxu0 0.0
    %397 = vmatpush1.msra.mxu0 0.0
    %398 = vmatprep.subr.mxu0 0.0
    %399 = vmatpush1.msra.mxu0 0.0
    %400 = vmatprep.subr.mxu0 0.0
    %401 = vmatpush1.msra.mxu0 %v59
    %402 = vmatprep.subr.mxu0 0.0
    %403 = vmatpush1.msra.mxu0 %v58
    %404 = vmatprep.subr.mxu0 0.0
    %405 = vmatpush1.msra.mxu0 %v57
    %406 = vmatprep.subr.mxu0 0.0
    %407 = vmatpush1.msra.mxu0 %v56
    %408 = vmatprep.subr.mxu0 0.0
    %409 = vmatpush2.msra.mxu0 0.0
    %410 = vmatprep.subr.mxu0 0.0
    %411 = vmatpush2.msra.mxu0 0.0
    %412 = vmatprep.subr.mxu0 0.0
    %413 = vmatpush2.msra.mxu0 0.0
    %414 = vmatprep.subr.mxu0 0.0
    %415 = vmatpush2.msra.mxu0 0.0
    %416 = vmatprep.subr.mxu0 0.0
    %417 = vmatpush2.msra.mxu0 0.0
    %418 = vmatprep.subr.mxu0 0.0
    %419 = vmatpush2.msra.mxu0 0.0
    %420 = vmatprep.subr.mxu0 0.0
    %421 = vmatpush2.msra.mxu0 0.0
    %422 = vmatprep.subr.mxu0 0.0
    %423 = vmatpush2.msra.mxu0 0.0
    %424 = vmatprep.subr.mxu0 0.0
    %425 = vmatpush2.msra.mxu0 0.0
    %426 = vmatprep.subr.mxu0 0.0
    %427 = vmatpush2.msra.mxu0 0.0
    %428 = vmatprep.subr.mxu0 0.0
    %429 = vmatpush2.msra.mxu0 0.0
    %430 = vmatprep.subr.mxu0 0.0
    %431 = vmatpush2.msra.mxu0 0.0
    %432 = vmatprep.subr.mxu0 0.0
    %433 = vmatpush2.msra.mxu0 0.0
    %434 = vmatprep.subr.mxu0 0.0
    %435 = vmatpush2.msra.mxu0 0.0
    %436 = vmatprep.subr.mxu0 0.0
    %437 = vmatpush2.msra.mxu0 0.0
    %438 = vmatprep.subr.mxu0 0.0
    %439 = vmatpush2.msra.mxu0 0.0
    %440 = vmatprep.mubr.f32.mxu0 0.0
    %441 = vmatmul.mubr.f32.gmra.mxu0 %v329
    %v442 = vpop.f32.mrf.mxu0
    %v443 = vadd.f32 %v251, %v442
    %v444 = vpop.f32.mrf.mxu0
    %445 = vmatprep.mubr.f32.mxu0 0.0
    %446 = vmatmul.mubr.f32.gmra.mxu0 %v332
    %v447 = vpop.f32.mrf.mxu0
    %v448 = vadd.f32 %v255, %v447
    %v449 = vpop.f32.mrf.mxu0
    %450 = vmatprep.mubr.f32.mxu0 0.0
    %451 = vmatmul.mubr.f32.gmra.mxu0 %v335
    %v452 = vpop.f32.mrf.mxu0
    %v453 = vadd.f32 %v259, %v452
    %v454 = vpop.f32.mrf.mxu0
    %455 = vmatprep.mubr.f32.mxu0 0.0
    %456 = vmatmul.mubr.f32.gmra.mxu0 %v338
    %v457 = vpop.f32.mrf.mxu0
    %v458 = vadd.f32 %v263, %v457
    %v459 = vpop.f32.mrf.mxu0
    %460 = vmatprep.mubr.f32.mxu0 0.0
    %461 = vmatmul.mubr.f32.gmra.mxu0 %v341
    %v462 = vpop.f32.mrf.mxu0
    %v463 = vadd.f32 %v267, %v462
    %v464 = vpop.f32.mrf.mxu0
    %465 = vmatprep.mubr.f32.mxu0 0.0
    %466 = vmatmul.mubr.f32.gmra.mxu0 %v344
    %v467 = vpop.f32.mrf.mxu0
    %v468 = vadd.f32 %v271, %v467
    %v469 = vpop.f32.mrf.mxu0
    %470 = vmatprep.mubr.f32.mxu0 0.0
    %471 = vmatmul.mubr.f32.gmra.mxu0 %v347
    %v472 = vpop.f32.mrf.mxu0
    %v473 = vadd.f32 %v275, %v472
    %v474 = vpop.f32.mrf.mxu0
    %475 = vmatprep.mubr.f32.mxu0 0.0
    %476 = vmatmul.mubr.f32.gmra.mxu0 %v350
    %v477 = vpop.f32.mrf.mxu0
    %v478 = vadd.f32 %v279, %v477
    %v479 = vpop.f32.mrf.mxu0
    %480 = vmatprep.mubr.f32.mxu0 0.0
    %481 = vmatmul.mubr.f32.gmra.mxu0 %v353
    %v482 = vpop.f32.mrf.mxu0
    %v483 = vadd.f32 %v283, %v482
    %v484 = vpop.f32.mrf.mxu0
    %485 = vmatprep.mubr.f32.mxu0 0.0
    %486 = vmatmul.mubr.f32.gmra.mxu0 %v356
    %v487 = vpop.f32.mrf.mxu0
    %v488 = vadd.f32 %v287, %v487
    %v489 = vpop.f32.mrf.mxu0
    %490 = vmatprep.mubr.f32.mxu0 0.0
    %491 = vmatmul.mubr.f32.gmra.mxu0 %v359
    %v492 = vpop.f32.mrf.mxu0
    %v493 = vadd.f32 %v291, %v492
    %v494 = vpop.f32.mrf.mxu0
    %495 = vmatprep.mubr.f32.mxu0 0.0
    %496 = vmatmul.mubr.f32.gmra.mxu0 %v362
    %v497 = vpop.f32.mrf.mxu0
    %v498 = vadd.f32 %v295, %v497
    %v499 = vpop.f32.mrf.mxu0
    %500 = vmatprep.mubr.f32.mxu0 0.0
    %501 = vmatmul.mubr.f32.gmra.mxu0 %v365
    %v502 = vpop.f32.mrf.mxu0
    %v503 = vadd.f32 %v299, %v502
    %v504 = vpop.f32.mrf.mxu0
    %505 = vmatprep.mubr.f32.mxu0 0.0
    %506 = vmatmul.mubr.f32.gmra.mxu0 %v368
    %v507 = vpop.f32.mrf.mxu0
    %v508 = vadd.f32 %v303, %v507
    %v509 = vpop.f32.mrf.mxu0
    %510 = vmatprep.mubr.f32.mxu0 0.0
    %511 = vmatmul.mubr.f32.gmra.mxu0 %v371
    %v512 = vpop.f32.mrf.mxu0
    %v513 = vadd.f32 %v307, %v512
    %v514 = vpop.f32.mrf.mxu0
    %515 = vmatprep.mubr.f32.mxu0 0.0
    %516 = vmatmul.mubr.f32.gmra.mxu0 %v374
    %v517 = vpop.f32.mrf.mxu0
    %v518 = vadd.f32 %v311, %v517
    %v519 = vpop.f32.mrf.mxu0
    %520 = vdwg.mxu0
    %v521 = vld [vmem:[%s5] sm:$0x1]
    %v523 = vlaneseq
    %v524 = vshrl.u32 %v523, 7
    %v525 = vsub.s32 0, %v524
    %v526 = vrot.slane %v521, %v525
    %v528 = vadd.f32 %v443, %v526
    %v529 = vadd.f32 %v448, %v526
    %v530 = vadd.f32 %v453, %v526
    %v531 = vadd.f32 %v458, %v526
    %v532 = vadd.f32 %v463, %v526
    %v533 = vadd.f32 %v468, %v526
    %v534 = vadd.f32 %v473, %v526
    %v535 = vadd.f32 %v478, %v526
    %v536 = vadd.f32 %v483, %v526
    %v537 = vadd.f32 %v488, %v526
    %v538 = vadd.f32 %v493, %v526
    %v539 = vadd.f32 %v498, %v526
    %v540 = vadd.f32 %v503, %v526
    %v541 = vadd.f32 %v508, %v526
    %v542 = vadd.f32 %v513, %v526
    %v543 = vadd.f32 %v518, %v526
    %v544 = vmax.f32 %v528, 0.0
    %v545 = vmax.f32 %v529, 0.0
    %v546 = vmax.f32 %v530, 0.0
    %v547 = vmax.f32 %v531, 0.0
    %v548 = vmax.f32 %v532, 0.0
    %v549 = vmax.f32 %v533, 0.0
    %v550 = vmax.f32 %v534, 0.0
    %v551 = vmax.f32 %v535, 0.0
    %v552 = vmax.f32 %v536, 0.0
    %v553 = vmax.f32 %v537, 0.0
    %v554 = vmax.f32 %v538, 0.0
    %v555 = vmax.f32 %v539, 0.0
    %v556 = vmax.f32 %v540, 0.0
    %v557 = vmax.f32 %v541, 0.0
    %v558 = vmax.f32 %v542, 0.0
    %v559 = vmax.f32 %v543, 0.0
    %v560 = vld [vmem:[%s4] sm:$0x1]
    %v562 = vlaneseq
    %v563 = vshrl.u32 %v562, 7
    %v564 = vsub.s32 0, %v563
    %v565 = vrot.slane %v560, %v564
    %v567 = vmul.f32 %v544, %v565
    %v568 = vmul.f32 %v545, %v565
    %v569 = vmul.f32 %v546, %v565
    %v570 = vmul.f32 %v547, %v565
    %v571 = vmul.f32 %v548, %v565
    %v572 = vmul.f32 %v549, %v565
    %v573 = vmul.f32 %v550, %v565
    %v574 = vmul.f32 %v551, %v565
    %v575 = vmul.f32 %v552, %v565
    %v576 = vmul.f32 %v553, %v565
    %v577 = vmul.f32 %v554, %v565
    %v578 = vmul.f32 %v555, %v565
    %v579 = vmul.f32 %v556, %v565
    %v580 = vmul.f32 %v557, %v565
    %v581 = vmul.f32 %v558, %v565
    %v582 = vmul.f32 %v559, %v565
    %vm583 = vcmask 130048
    %v584 = vsel %vm583, %v567, 0.0
    %585 = vadd.xlane.f32.xlu0 %v584
    %v586 = vpop.xlane.xlu0 %585
    %v587 = vsel %vm583, %v568, 0.0
    %588 = vadd.xlane.f32.xlu0 %v587
    %v589 = vpop.xlane.xlu0 %588
    %v590 = vsel %vm583, %v569, 0.0
    %591 = vadd.xlane.f32.xlu0 %v590
    %v592 = vpop.xlane.xlu0 %591
    %v593 = vsel %vm583, %v570, 0.0
    %594 = vadd.xlane.f32.xlu0 %v593
    %v595 = vpop.xlane.xlu0 %594
    %v596 = vsel %vm583, %v571, 0.0
    %597 = vadd.xlane.f32.xlu0 %v596
    %v598 = vpop.xlane.xlu0 %597
    %v599 = vsel %vm583, %v572, 0.0
    %600 = vadd.xlane.f32.xlu0 %v599
    %v601 = vpop.xlane.xlu0 %600
    %v602 = vsel %vm583, %v573, 0.0
    %603 = vadd.xlane.f32.xlu0 %v602
    %v604 = vpop.xlane.xlu0 %603
    %v605 = vsel %vm583, %v574, 0.0
    %606 = vadd.xlane.f32.xlu0 %v605
    %v607 = vpop.xlane.xlu0 %606
    %v608 = vsel %vm583, %v575, 0.0
    %609 = vadd.xlane.f32.xlu0 %v608
    %v610 = vpop.xlane.xlu0 %609
    %v611 = vsel %vm583, %v576, 0.0
    %612 = vadd.xlane.f32.xlu0 %v611
    %v613 = vpop.xlane.xlu0 %612
    %v614 = vsel %vm583, %v577, 0.0
    %615 = vadd.xlane.f32.xlu0 %v614
    %v616 = vpop.xlane.xlu0 %615
    %v617 = vsel %vm583, %v578, 0.0
    %618 = vadd.xlane.f32.xlu0 %v617
    %v619 = vpop.xlane.xlu0 %618
    %v620 = vsel %vm583, %v579, 0.0
    %621 = vadd.xlane.f32.xlu0 %v620
    %v622 = vpop.xlane.xlu0 %621
    %v623 = vsel %vm583, %v580, 0.0
    %624 = vadd.xlane.f32.xlu0 %v623
    %v625 = vpop.xlane.xlu0 %624
    %v626 = vsel %vm583, %v581, 0.0
    %627 = vadd.xlane.f32.xlu0 %v626
    %v628 = vpop.xlane.xlu0 %627
    %v629 = vsel %vm583, %v582, 0.0
    %630 = vadd.xlane.f32.xlu0 %v629
    %v631 = vpop.xlane.xlu0 %630
    %v648 = vlaneseq
    %v649 = vand.u32 %v648, 127
    %v650 = vlaneseq
    %v651 = vshrl.u32 %v650, 7
    %v652 = vsub.s32 %v649, %v651
    %v653 = vrot.slane %v586, %v652
    %v654 = vlaneseq
    %v655 = vshrl.u32 %v654, 7
    %v656 = vsub.s32 %v649, %v655
    %v657 = vrot.slane %v589, %v656
    %v658 = vlaneseq
    %v659 = vshrl.u32 %v658, 7
    %v660 = vsub.s32 %v649, %v659
    %v661 = vrot.slane %v592, %v660
    %v662 = vlaneseq
    %v663 = vshrl.u32 %v662, 7
    %v664 = vsub.s32 %v649, %v663
    %v665 = vrot.slane %v595, %v664
    %v666 = vlaneseq
    %v667 = vshrl.u32 %v666, 7
    %v668 = vsub.s32 %v649, %v667
    %v669 = vrot.slane %v598, %v668
    %v670 = vlaneseq
    %v671 = vshrl.u32 %v670, 7
    %v672 = vsub.s32 %v649, %v671
    %v673 = vrot.slane %v601, %v672
    %v674 = vlaneseq
    %v675 = vshrl.u32 %v674, 7
    %v676 = vsub.s32 %v649, %v675
    %v677 = vrot.slane %v604, %v676
    %v678 = vlaneseq
    %v679 = vshrl.u32 %v678, 7
    %v680 = vsub.s32 %v649, %v679
    %v681 = vrot.slane %v607, %v680
    %v682 = vlaneseq
    %v683 = vshrl.u32 %v682, 7
    %v684 = vsub.s32 %v649, %v683
    %v685 = vrot.slane %v610, %v684
    %v686 = vlaneseq
    %v687 = vshrl.u32 %v686, 7
    %v688 = vsub.s32 %v649, %v687
    %v689 = vrot.slane %v613, %v688
    %v690 = vlaneseq
    %v691 = vshrl.u32 %v690, 7
    %v692 = vsub.s32 %v649, %v691
    %v693 = vrot.slane %v616, %v692
    %v694 = vlaneseq
    %v695 = vshrl.u32 %v694, 7
    %v696 = vsub.s32 %v649, %v695
    %v697 = vrot.slane %v619, %v696
    %v698 = vlaneseq
    %v699 = vshrl.u32 %v698, 7
    %v700 = vsub.s32 %v649, %v699
    %v701 = vrot.slane %v622, %v700
    %v702 = vlaneseq
    %v703 = vshrl.u32 %v702, 7
    %v704 = vsub.s32 %v649, %v703
    %v705 = vrot.slane %v625, %v704
    %v706 = vlaneseq
    %v707 = vshrl.u32 %v706, 7
    %v708 = vsub.s32 %v649, %v707
    %v709 = vrot.slane %v628, %v708
    %v710 = vlaneseq
    %v711 = vshrl.u32 %v710, 7
    %v712 = vsub.s32 %v649, %v711
    %v713 = vrot.slane %v631, %v712
    %vm714 = vcmask 1041409
    %v715 = vsel %vm714, %v657, %v653
    %vm716 = vcmask 1042434
    %v717 = vsel %vm716, %v661, %v715
    %vm718 = vcmask 1043459
    %v719 = vsel %vm718, %v665, %v717
    %vm720 = vcmask 1044484
    %v721 = vsel %vm720, %v669, %v719
    %vm722 = vcmask 1045509
    %v723 = vsel %vm722, %v673, %v721
    %vm724 = vcmask 1046534
    %v725 = vsel %vm724, %v677, %v723
    %vm726 = vcmask 1047559
    %v727 = vsel %vm726, %v681, %v725
    %v728 = vsel %vm714, %v689, %v685
    %v729 = vsel %vm716, %v693, %v728
    %v730 = vsel %vm718, %v697, %v729
    %v731 = vsel %vm720, %v701, %v730
    %v732 = vsel %vm722, %v705, %v731
    %v733 = vsel %vm724, %v709, %v732
    %v734 = vsel %vm726, %v713, %v733
    %vm737 = vcmask 64512
    %v738 = vsel %vm737, %v727, -inf
    %739 = vmax.xlane.f32.xlu0 %v738
    %v740 = vpop.xlane.xlu0 %739
    %v741 = vsel %vm737, %v734, -inf
    %742 = vmax.xlane.f32.xlu0 %v741
    %v743 = vpop.xlane.xlu0 %742
    %v746 = vlaneseq
    %v747 = vshrl.u32 %v746, 7
    %v748 = vsub.s32 0, %v747
    %v749 = vrot.slane %v740, %v748
    %v750 = vlaneseq
    %v751 = vshrl.u32 %v750, 7
    %v752 = vsub.s32 1, %v751
    %v753 = vrot.slane %v740, %v752
    %v754 = vlaneseq
    %v755 = vshrl.u32 %v754, 7
    %v756 = vsub.s32 2, %v755
    %v757 = vrot.slane %v740, %v756
    %v758 = vlaneseq
    %v759 = vshrl.u32 %v758, 7
    %v760 = vsub.s32 3, %v759
    %v761 = vrot.slane %v740, %v760
    %v762 = vlaneseq
    %v763 = vshrl.u32 %v762, 7
    %v764 = vsub.s32 4, %v763
    %v765 = vrot.slane %v740, %v764
    %v766 = vlaneseq
    %v767 = vshrl.u32 %v766, 7
    %v768 = vsub.s32 5, %v767
    %v769 = vrot.slane %v740, %v768
    %v770 = vlaneseq
    %v771 = vshrl.u32 %v770, 7
    %v772 = vsub.s32 6, %v771
    %v773 = vrot.slane %v740, %v772
    %v774 = vlaneseq
    %v775 = vshrl.u32 %v774, 7
    %v776 = vsub.s32 7, %v775
    %v777 = vrot.slane %v740, %v776
    %v778 = vlaneseq
    %v779 = vshrl.u32 %v778, 7
    %v780 = vsub.s32 0, %v779
    %v781 = vrot.slane %v743, %v780
    %v782 = vlaneseq
    %v783 = vshrl.u32 %v782, 7
    %v784 = vsub.s32 1, %v783
    %v785 = vrot.slane %v743, %v784
    %v786 = vlaneseq
    %v787 = vshrl.u32 %v786, 7
    %v788 = vsub.s32 2, %v787
    %v789 = vrot.slane %v743, %v788
    %v790 = vlaneseq
    %v791 = vshrl.u32 %v790, 7
    %v792 = vsub.s32 3, %v791
    %v793 = vrot.slane %v743, %v792
    %v794 = vlaneseq
    %v795 = vshrl.u32 %v794, 7
    %v796 = vsub.s32 4, %v795
    %v797 = vrot.slane %v743, %v796
    %v798 = vlaneseq
    %v799 = vshrl.u32 %v798, 7
    %v800 = vsub.s32 5, %v799
    %v801 = vrot.slane %v743, %v800
    %v802 = vlaneseq
    %v803 = vshrl.u32 %v802, 7
    %v804 = vsub.s32 6, %v803
    %v805 = vrot.slane %v743, %v804
    %v806 = vlaneseq
    %v807 = vshrl.u32 %v806, 7
    %v808 = vsub.s32 7, %v807
    %v809 = vrot.slane %v743, %v808
    %v826 = vsub.f32 %v586, %v749
    %v827 = vsub.f32 %v589, %v753
    %v828 = vsub.f32 %v592, %v757
    %v829 = vsub.f32 %v595, %v761
    %v830 = vsub.f32 %v598, %v765
    %v831 = vsub.f32 %v601, %v769
    %v832 = vsub.f32 %v604, %v773
    %v833 = vsub.f32 %v607, %v777
    %v834 = vsub.f32 %v610, %v781
    %v835 = vsub.f32 %v613, %v785
    %v836 = vsub.f32 %v616, %v789
    %v837 = vsub.f32 %v619, %v793
    %v838 = vsub.f32 %v622, %v797
    %v839 = vsub.f32 %v625, %v801
    %v840 = vsub.f32 %v628, %v805
    %v841 = vsub.f32 %v631, %v809
    %v842 = vmul.f32 %v826, 1.442695
    %v843 = vpow.pop %v842
    %v844 = vmul.f32 %v827, 1.442695
    %v845 = vpow.pop %v844
    %v846 = vmul.f32 %v828, 1.442695
    %v847 = vpow.pop %v846
    %v848 = vmul.f32 %v829, 1.442695
    %v849 = vpow.pop %v848
    %v850 = vmul.f32 %v830, 1.442695
    %v851 = vpow.pop %v850
    %v852 = vmul.f32 %v831, 1.442695
    %v853 = vpow.pop %v852
    %v854 = vmul.f32 %v832, 1.442695
    %v855 = vpow.pop %v854
    %v856 = vmul.f32 %v833, 1.442695
    %v857 = vpow.pop %v856
    %v858 = vmul.f32 %v834, 1.442695
    %v859 = vpow.pop %v858
    %v860 = vmul.f32 %v835, 1.442695
    %v861 = vpow.pop %v860
    %v862 = vmul.f32 %v836, 1.442695
    %v863 = vpow.pop %v862
    %v864 = vmul.f32 %v837, 1.442695
    %v865 = vpow.pop %v864
    %v866 = vmul.f32 %v838, 1.442695
    %v867 = vpow.pop %v866
    %v868 = vmul.f32 %v839, 1.442695
    %v869 = vpow.pop %v868
    %v870 = vmul.f32 %v840, 1.442695
    %v871 = vpow.pop %v870
    %v872 = vmul.f32 %v841, 1.442695
    %v873 = vpow.pop %v872
    %890 = vset.pattern.permute.xlu0 0
    %891 = vperm.xlu0 %890, %v843
    %v892 = vpop.permute.xlu0 %891
    %893 = vset.pattern.permute.xlu0 0
    %894 = vperm.xlu0 %893, %v845
    %v895 = vpop.permute.xlu0 %894
    %896 = vset.pattern.permute.xlu0 0
    %897 = vperm.xlu0 %896, %v847
    %v898 = vpop.permute.xlu0 %897
    %899 = vset.pattern.permute.xlu0 0
    %900 = vperm.xlu0 %899, %v849
    %v901 = vpop.permute.xlu0 %900
    %902 = vset.pattern.permute.xlu0 0
    %903 = vperm.xlu0 %902, %v851
    %v904 = vpop.permute.xlu0 %903
    %905 = vset.pattern.permute.xlu0 0
    %906 = vperm.xlu0 %905, %v853
    %v907 = vpop.permute.xlu0 %906
    %908 = vset.pattern.permute.xlu0 0
    %909 = vperm.xlu0 %908, %v855
    %v910 = vpop.permute.xlu0 %909
    %911 = vset.pattern.permute.xlu0 0
    %912 = vperm.xlu0 %911, %v857
    %v913 = vpop.permute.xlu0 %912
    %914 = vset.pattern.permute.xlu0 0
    %915 = vperm.xlu0 %914, %v859
    %v916 = vpop.permute.xlu0 %915
    %917 = vset.pattern.permute.xlu0 0
    %918 = vperm.xlu0 %917, %v861
    %v919 = vpop.permute.xlu0 %918
    %920 = vset.pattern.permute.xlu0 0
    %921 = vperm.xlu0 %920, %v863
    %v922 = vpop.permute.xlu0 %921
    %923 = vset.pattern.permute.xlu0 0
    %924 = vperm.xlu0 %923, %v865
    %v925 = vpop.permute.xlu0 %924
    %926 = vset.pattern.permute.xlu0 0
    %927 = vperm.xlu0 %926, %v867
    %v928 = vpop.permute.xlu0 %927
    %929 = vset.pattern.permute.xlu0 0
    %930 = vperm.xlu0 %929, %v869
    %v931 = vpop.permute.xlu0 %930
    %932 = vset.pattern.permute.xlu0 0
    %933 = vperm.xlu0 %932, %v871
    %v934 = vpop.permute.xlu0 %933
    %935 = vset.pattern.permute.xlu0 0
    %936 = vperm.xlu0 %935, %v873
    %v937 = vpop.permute.xlu0 %936
    %v938 = vlaneseq
    %v939 = vshrl.u32 %v938, 7
    %v940 = vsub.s32 %v649, %v939
    %v941 = vrot.slane %v892, %v940
    %v942 = vlaneseq
    %v943 = vshrl.u32 %v942, 7
    %v944 = vsub.s32 %v649, %v943
    %v945 = vrot.slane %v895, %v944
    %v946 = vlaneseq
    %v947 = vshrl.u32 %v946, 7
    %v948 = vsub.s32 %v649, %v947
    %v949 = vrot.slane %v898, %v948
    %v950 = vlaneseq
    %v951 = vshrl.u32 %v950, 7
    %v952 = vsub.s32 %v649, %v951
    %v953 = vrot.slane %v901, %v952
    %v954 = vlaneseq
    %v955 = vshrl.u32 %v954, 7
    %v956 = vsub.s32 %v649, %v955
    %v957 = vrot.slane %v904, %v956
    %v958 = vlaneseq
    %v959 = vshrl.u32 %v958, 7
    %v960 = vsub.s32 %v649, %v959
    %v961 = vrot.slane %v907, %v960
    %v962 = vlaneseq
    %v963 = vshrl.u32 %v962, 7
    %v964 = vsub.s32 %v649, %v963
    %v965 = vrot.slane %v910, %v964
    %v966 = vlaneseq
    %v967 = vshrl.u32 %v966, 7
    %v968 = vsub.s32 %v649, %v967
    %v969 = vrot.slane %v913, %v968
    %v970 = vlaneseq
    %v971 = vshrl.u32 %v970, 7
    %v972 = vsub.s32 %v649, %v971
    %v973 = vrot.slane %v916, %v972
    %v974 = vlaneseq
    %v975 = vshrl.u32 %v974, 7
    %v976 = vsub.s32 %v649, %v975
    %v977 = vrot.slane %v919, %v976
    %v978 = vlaneseq
    %v979 = vshrl.u32 %v978, 7
    %v980 = vsub.s32 %v649, %v979
    %v981 = vrot.slane %v922, %v980
    %v982 = vlaneseq
    %v983 = vshrl.u32 %v982, 7
    %v984 = vsub.s32 %v649, %v983
    %v985 = vrot.slane %v925, %v984
    %v986 = vlaneseq
    %v987 = vshrl.u32 %v986, 7
    %v988 = vsub.s32 %v649, %v987
    %v989 = vrot.slane %v928, %v988
    %v990 = vlaneseq
    %v991 = vshrl.u32 %v990, 7
    %v992 = vsub.s32 %v649, %v991
    %v993 = vrot.slane %v931, %v992
    %v994 = vlaneseq
    %v995 = vshrl.u32 %v994, 7
    %v996 = vsub.s32 %v649, %v995
    %v997 = vrot.slane %v934, %v996
    %v998 = vlaneseq
    %v999 = vshrl.u32 %v998, 7
    %v1000 = vsub.s32 %v649, %v999
    %v1001 = vrot.slane %v937, %v1000
    %v1002 = vsel %vm714, %v945, %v941
    %v1003 = vsel %vm716, %v949, %v1002
    %v1004 = vsel %vm718, %v953, %v1003
    %v1005 = vsel %vm720, %v957, %v1004
    %v1006 = vsel %vm722, %v961, %v1005
    %v1007 = vsel %vm724, %v965, %v1006
    %v1008 = vsel %vm726, %v969, %v1007
    %v1009 = vsel %vm714, %v977, %v973
    %v1010 = vsel %vm716, %v981, %v1009
    %v1011 = vsel %vm718, %v985, %v1010
    %v1012 = vsel %vm720, %v989, %v1011
    %v1013 = vsel %vm722, %v993, %v1012
    %v1014 = vsel %vm724, %v997, %v1013
    %v1015 = vsel %vm726, %v1001, %v1014
    %v1018 = vsel %vm737, %v1008, 0.0
    %1019 = vadd.xlane.f32.xlu0 %v1018
    %v1020 = vpop.xlane.xlu0 %1019
    %v1021 = vsel %vm737, %v1015, 0.0
    %1022 = vadd.xlane.f32.xlu0 %v1021
    %v1023 = vpop.xlane.xlu0 %1022
    %v1026 = vlaneseq
    %v1027 = vshrl.u32 %v1026, 7
    %v1028 = vsub.s32 0, %v1027
    %v1029 = vrot.slane %v1020, %v1028
    %v1030 = vlaneseq
    %v1031 = vshrl.u32 %v1030, 7
    %v1032 = vsub.s32 1, %v1031
    %v1033 = vrot.slane %v1020, %v1032
    %v1034 = vlaneseq
    %v1035 = vshrl.u32 %v1034, 7
    %v1036 = vsub.s32 2, %v1035
    %v1037 = vrot.slane %v1020, %v1036
    %v1038 = vlaneseq
    %v1039 = vshrl.u32 %v1038, 7
    %v1040 = vsub.s32 3, %v1039
    %v1041 = vrot.slane %v1020, %v1040
    %v1042 = vlaneseq
    %v1043 = vshrl.u32 %v1042, 7
    %v1044 = vsub.s32 4, %v1043
    %v1045 = vrot.slane %v1020, %v1044
    %v1046 = vlaneseq
    %v1047 = vshrl.u32 %v1046, 7
    %v1048 = vsub.s32 5, %v1047
    %v1049 = vrot.slane %v1020, %v1048
    %v1050 = vlaneseq
    %v1051 = vshrl.u32 %v1050, 7
    %v1052 = vsub.s32 6, %v1051
    %v1053 = vrot.slane %v1020, %v1052
    %v1054 = vlaneseq
    %v1055 = vshrl.u32 %v1054, 7
    %v1056 = vsub.s32 7, %v1055
    %v1057 = vrot.slane %v1020, %v1056
    %v1058 = vlaneseq
    %v1059 = vshrl.u32 %v1058, 7
    %v1060 = vsub.s32 0, %v1059
    %v1061 = vrot.slane %v1023, %v1060
    %v1062 = vlaneseq
    %v1063 = vshrl.u32 %v1062, 7
    %v1064 = vsub.s32 1, %v1063
    %v1065 = vrot.slane %v1023, %v1064
    %v1066 = vlaneseq
    %v1067 = vshrl.u32 %v1066, 7
    %v1068 = vsub.s32 2, %v1067
    %v1069 = vrot.slane %v1023, %v1068
    %v1070 = vlaneseq
    %v1071 = vshrl.u32 %v1070, 7
    %v1072 = vsub.s32 3, %v1071
    %v1073 = vrot.slane %v1023, %v1072
    %v1074 = vlaneseq
    %v1075 = vshrl.u32 %v1074, 7
    %v1076 = vsub.s32 4, %v1075
    %v1077 = vrot.slane %v1023, %v1076
    %v1078 = vlaneseq
    %v1079 = vshrl.u32 %v1078, 7
    %v1080 = vsub.s32 5, %v1079
    %v1081 = vrot.slane %v1023, %v1080
    %v1082 = vlaneseq
    %v1083 = vshrl.u32 %v1082, 7
    %v1084 = vsub.s32 6, %v1083
    %v1085 = vrot.slane %v1023, %v1084
    %v1086 = vlaneseq
    %v1087 = vshrl.u32 %v1086, 7
    %v1088 = vsub.s32 7, %v1087
    %v1089 = vrot.slane %v1023, %v1088
    %v1106 = vrcp.pop %v1029
    %v1107 = vmul.f32 %v843, %v1106
    %v1108 = vrcp.pop %v1033
    %v1109 = vmul.f32 %v845, %v1108
    %v1110 = vrcp.pop %v1037
    %v1111 = vmul.f32 %v847, %v1110
    %v1112 = vrcp.pop %v1041
    %v1113 = vmul.f32 %v849, %v1112
    %v1114 = vrcp.pop %v1045
    %v1115 = vmul.f32 %v851, %v1114
    %v1116 = vrcp.pop %v1049
    %v1117 = vmul.f32 %v853, %v1116
    %v1118 = vrcp.pop %v1053
    %v1119 = vmul.f32 %v855, %v1118
    %v1120 = vrcp.pop %v1057
    %v1121 = vmul.f32 %v857, %v1120
    %v1122 = vrcp.pop %v1061
    %v1123 = vmul.f32 %v859, %v1122
    %v1124 = vrcp.pop %v1065
    %v1125 = vmul.f32 %v861, %v1124
    %v1126 = vrcp.pop %v1069
    %v1127 = vmul.f32 %v863, %v1126
    %v1128 = vrcp.pop %v1073
    %v1129 = vmul.f32 %v865, %v1128
    %v1130 = vrcp.pop %v1077
    %v1131 = vmul.f32 %v867, %v1130
    %v1132 = vrcp.pop %v1081
    %v1133 = vmul.f32 %v869, %v1132
    %v1134 = vrcp.pop %v1085
    %v1135 = vmul.f32 %v871, %v1134
    %v1136 = vrcp.pop %v1089
    %v1137 = vmul.f32 %v873, %v1136
    %1139 = vset.pattern.permute.xlu0 0
    %1140 = vperm.xlu0 %1139, %v1107
    %v1141 = vpop.permute.xlu0 %1140
    %1144 = vset.pattern.permute.xlu0 0
    %1145 = vperm.xlu0 %1144, %v1109
    %v1146 = vpop.permute.xlu0 %1145
    %1149 = vset.pattern.permute.xlu0 0
    %1150 = vperm.xlu0 %1149, %v1111
    %v1151 = vpop.permute.xlu0 %1150
    %1154 = vset.pattern.permute.xlu0 0
    %1155 = vperm.xlu0 %1154, %v1113
    %v1156 = vpop.permute.xlu0 %1155
    %1159 = vset.pattern.permute.xlu0 0
    %1160 = vperm.xlu0 %1159, %v1115
    %v1161 = vpop.permute.xlu0 %1160
    %1164 = vset.pattern.permute.xlu0 0
    %1165 = vperm.xlu0 %1164, %v1117
    %v1166 = vpop.permute.xlu0 %1165
    %1169 = vset.pattern.permute.xlu0 0
    %1170 = vperm.xlu0 %1169, %v1119
    %v1171 = vpop.permute.xlu0 %1170
    %1174 = vset.pattern.permute.xlu0 0
    %1175 = vperm.xlu0 %1174, %v1121
    %v1176 = vpop.permute.xlu0 %1175
    %1179 = vset.pattern.permute.xlu0 0
    %1180 = vperm.xlu0 %1179, %v1123
    %v1181 = vpop.permute.xlu0 %1180
    %1184 = vset.pattern.permute.xlu0 0
    %1185 = vperm.xlu0 %1184, %v1125
    %v1186 = vpop.permute.xlu0 %1185
    %1189 = vset.pattern.permute.xlu0 0
    %1190 = vperm.xlu0 %1189, %v1127
    %v1191 = vpop.permute.xlu0 %1190
    %1194 = vset.pattern.permute.xlu0 0
    %1195 = vperm.xlu0 %1194, %v1129
    %v1196 = vpop.permute.xlu0 %1195
    %1199 = vset.pattern.permute.xlu0 0
    %1200 = vperm.xlu0 %1199, %v1131
    %v1201 = vpop.permute.xlu0 %1200
    %1204 = vset.pattern.permute.xlu0 0
    %1205 = vperm.xlu0 %1204, %v1133
    %v1206 = vpop.permute.xlu0 %1205
    %1209 = vset.pattern.permute.xlu0 0
    %1210 = vperm.xlu0 %1209, %v1135
    %v1211 = vpop.permute.xlu0 %1210
    %1214 = vset.pattern.permute.xlu0 0
    %1215 = vperm.xlu0 %1214, %v1137
    %v1216 = vpop.permute.xlu0 %1215
    %v1218 = vmul.f32 %v40, %v1141
    %v1219 = vmul.f32 %v41, %v1146
    %v1220 = vmul.f32 %v42, %v1151
    %v1221 = vmul.f32 %v43, %v1156
    %v1222 = vmul.f32 %v44, %v1161
    %v1223 = vmul.f32 %v45, %v1166
    %v1224 = vmul.f32 %v46, %v1171
    %v1225 = vmul.f32 %v47, %v1176
    %v1226 = vmul.f32 %v48, %v1181
    %v1227 = vmul.f32 %v49, %v1186
    %v1228 = vmul.f32 %v50, %v1191
    %v1229 = vmul.f32 %v51, %v1196
    %v1230 = vmul.f32 %v52, %v1201
    %v1231 = vmul.f32 %v53, %v1206
    %v1232 = vmul.f32 %v54, %v1211
    %v1233 = vmul.f32 %v55, %v1216
    %v1234 = vsel %vm66, %v1218, 0.0
    %v1235 = vrot.slane %v1234, 4
    %v1236 = vadd.f32 %v1234, %v1235
    %v1237 = vrot.slane %v1236, 2
    %v1238 = vadd.f32 %v1236, %v1237
    %v1239 = vrot.slane %v1238, 1
    %v1240 = vadd.f32 %v1238, %v1239
    %v1241 = vsel %vm66, %v1219, 0.0
    %v1242 = vrot.slane %v1241, 4
    %v1243 = vadd.f32 %v1241, %v1242
    %v1244 = vrot.slane %v1243, 2
    %v1245 = vadd.f32 %v1243, %v1244
    %v1246 = vrot.slane %v1245, 1
    %v1247 = vadd.f32 %v1245, %v1246
    %v1248 = vsel %vm66, %v1220, 0.0
    %v1249 = vrot.slane %v1248, 4
    %v1250 = vadd.f32 %v1248, %v1249
    %v1251 = vrot.slane %v1250, 2
    %v1252 = vadd.f32 %v1250, %v1251
    %v1253 = vrot.slane %v1252, 1
    %v1254 = vadd.f32 %v1252, %v1253
    %v1255 = vsel %vm66, %v1221, 0.0
    %v1256 = vrot.slane %v1255, 4
    %v1257 = vadd.f32 %v1255, %v1256
    %v1258 = vrot.slane %v1257, 2
    %v1259 = vadd.f32 %v1257, %v1258
    %v1260 = vrot.slane %v1259, 1
    %v1261 = vadd.f32 %v1259, %v1260
    %v1262 = vsel %vm66, %v1222, 0.0
    %v1263 = vrot.slane %v1262, 4
    %v1264 = vadd.f32 %v1262, %v1263
    %v1265 = vrot.slane %v1264, 2
    %v1266 = vadd.f32 %v1264, %v1265
    %v1267 = vrot.slane %v1266, 1
    %v1268 = vadd.f32 %v1266, %v1267
    %v1269 = vsel %vm66, %v1223, 0.0
    %v1270 = vrot.slane %v1269, 4
    %v1271 = vadd.f32 %v1269, %v1270
    %v1272 = vrot.slane %v1271, 2
    %v1273 = vadd.f32 %v1271, %v1272
    %v1274 = vrot.slane %v1273, 1
    %v1275 = vadd.f32 %v1273, %v1274
    %v1276 = vsel %vm66, %v1224, 0.0
    %v1277 = vrot.slane %v1276, 4
    %v1278 = vadd.f32 %v1276, %v1277
    %v1279 = vrot.slane %v1278, 2
    %v1280 = vadd.f32 %v1278, %v1279
    %v1281 = vrot.slane %v1280, 1
    %v1282 = vadd.f32 %v1280, %v1281
    %v1283 = vsel %vm66, %v1225, 0.0
    %v1284 = vrot.slane %v1283, 4
    %v1285 = vadd.f32 %v1283, %v1284
    %v1286 = vrot.slane %v1285, 2
    %v1287 = vadd.f32 %v1285, %v1286
    %v1288 = vrot.slane %v1287, 1
    %v1289 = vadd.f32 %v1287, %v1288
    %v1290 = vsel %vm66, %v1226, 0.0
    %v1291 = vrot.slane %v1290, 4
    %v1292 = vadd.f32 %v1290, %v1291
    %v1293 = vrot.slane %v1292, 2
    %v1294 = vadd.f32 %v1292, %v1293
    %v1295 = vrot.slane %v1294, 1
    %v1296 = vadd.f32 %v1294, %v1295
    %v1297 = vsel %vm66, %v1227, 0.0
    %v1298 = vrot.slane %v1297, 4
    %v1299 = vadd.f32 %v1297, %v1298
    %v1300 = vrot.slane %v1299, 2
    %v1301 = vadd.f32 %v1299, %v1300
    %v1302 = vrot.slane %v1301, 1
    %v1303 = vadd.f32 %v1301, %v1302
    %v1304 = vsel %vm66, %v1228, 0.0
    %v1305 = vrot.slane %v1304, 4
    %v1306 = vadd.f32 %v1304, %v1305
    %v1307 = vrot.slane %v1306, 2
    %v1308 = vadd.f32 %v1306, %v1307
    %v1309 = vrot.slane %v1308, 1
    %v1310 = vadd.f32 %v1308, %v1309
    %v1311 = vsel %vm66, %v1229, 0.0
    %v1312 = vrot.slane %v1311, 4
    %v1313 = vadd.f32 %v1311, %v1312
    %v1314 = vrot.slane %v1313, 2
    %v1315 = vadd.f32 %v1313, %v1314
    %v1316 = vrot.slane %v1315, 1
    %v1317 = vadd.f32 %v1315, %v1316
    %v1318 = vsel %vm66, %v1230, 0.0
    %v1319 = vrot.slane %v1318, 4
    %v1320 = vadd.f32 %v1318, %v1319
    %v1321 = vrot.slane %v1320, 2
    %v1322 = vadd.f32 %v1320, %v1321
    %v1323 = vrot.slane %v1322, 1
    %v1324 = vadd.f32 %v1322, %v1323
    %v1325 = vsel %vm66, %v1231, 0.0
    %v1326 = vrot.slane %v1325, 4
    %v1327 = vadd.f32 %v1325, %v1326
    %v1328 = vrot.slane %v1327, 2
    %v1329 = vadd.f32 %v1327, %v1328
    %v1330 = vrot.slane %v1329, 1
    %v1331 = vadd.f32 %v1329, %v1330
    %v1332 = vsel %vm66, %v1232, 0.0
    %v1333 = vrot.slane %v1332, 4
    %v1334 = vadd.f32 %v1332, %v1333
    %v1335 = vrot.slane %v1334, 2
    %v1336 = vadd.f32 %v1334, %v1335
    %v1337 = vrot.slane %v1336, 1
    %v1338 = vadd.f32 %v1336, %v1337
    %v1339 = vsel %vm66, %v1233, 0.0
    %v1340 = vrot.slane %v1339, 4
    %v1341 = vadd.f32 %v1339, %v1340
    %v1342 = vrot.slane %v1341, 2
    %v1343 = vadd.f32 %v1341, %v1342
    %v1344 = vrot.slane %v1343, 1
    %v1345 = vadd.f32 %v1343, %v1344
    %v1362 = vsel %vm714, %v1247, %v1240
    %v1363 = vsel %vm716, %v1254, %v1362
    %v1364 = vsel %vm718, %v1261, %v1363
    %v1365 = vsel %vm720, %v1268, %v1364
    %v1366 = vsel %vm722, %v1275, %v1365
    %v1367 = vsel %vm724, %v1282, %v1366
    %v1368 = vsel %vm726, %v1289, %v1367
    %v1369 = vsel %vm714, %v1303, %v1296
    %v1370 = vsel %vm716, %v1310, %v1369
    %v1371 = vsel %vm718, %v1317, %v1370
    %v1372 = vsel %vm720, %v1324, %v1371
    %v1373 = vsel %vm722, %v1331, %v1372
    %v1374 = vsel %vm724, %v1338, %v1373
    %v1375 = vsel %vm726, %v1345, %v1374
    %1378 = vst.msk [vmem:[#allocation5] sm:$0xff] %vm66, %v1368
    %1379 = vst.msk [vmem:[#allocation5 + $0x8] sm:$0xff] %vm66, %v1375
    %v1380 = vlaneseq
    %v1381 = vshrl.u32 %v1380, 7
    %v1382 = vsub.s32 %v649, %v1381
    %v1383 = vrot.slane %v1141, %v1382
    %v1384 = vlaneseq
    %v1385 = vshrl.u32 %v1384, 7
    %v1386 = vsub.s32 %v649, %v1385
    %v1387 = vrot.slane %v1146, %v1386
    %v1388 = vlaneseq
    %v1389 = vshrl.u32 %v1388, 7
    %v1390 = vsub.s32 %v649, %v1389
    %v1391 = vrot.slane %v1151, %v1390
    %v1392 = vlaneseq
    %v1393 = vshrl.u32 %v1392, 7
    %v1394 = vsub.s32 %v649, %v1393
    %v1395 = vrot.slane %v1156, %v1394
    %v1396 = vlaneseq
    %v1397 = vshrl.u32 %v1396, 7
    %v1398 = vsub.s32 %v649, %v1397
    %v1399 = vrot.slane %v1161, %v1398
    %v1400 = vlaneseq
    %v1401 = vshrl.u32 %v1400, 7
    %v1402 = vsub.s32 %v649, %v1401
    %v1403 = vrot.slane %v1166, %v1402
    %v1404 = vlaneseq
    %v1405 = vshrl.u32 %v1404, 7
    %v1406 = vsub.s32 %v649, %v1405
    %v1407 = vrot.slane %v1171, %v1406
    %v1408 = vlaneseq
    %v1409 = vshrl.u32 %v1408, 7
    %v1410 = vsub.s32 %v649, %v1409
    %v1411 = vrot.slane %v1176, %v1410
    %v1412 = vlaneseq
    %v1413 = vshrl.u32 %v1412, 7
    %v1414 = vsub.s32 %v649, %v1413
    %v1415 = vrot.slane %v1181, %v1414
    %v1416 = vlaneseq
    %v1417 = vshrl.u32 %v1416, 7
    %v1418 = vsub.s32 %v649, %v1417
    %v1419 = vrot.slane %v1186, %v1418
    %v1420 = vlaneseq
    %v1421 = vshrl.u32 %v1420, 7
    %v1422 = vsub.s32 %v649, %v1421
    %v1423 = vrot.slane %v1191, %v1422
    %v1424 = vlaneseq
    %v1425 = vshrl.u32 %v1424, 7
    %v1426 = vsub.s32 %v649, %v1425
    %v1427 = vrot.slane %v1196, %v1426
    %v1428 = vlaneseq
    %v1429 = vshrl.u32 %v1428, 7
    %v1430 = vsub.s32 %v649, %v1429
    %v1431 = vrot.slane %v1201, %v1430
    %v1432 = vlaneseq
    %v1433 = vshrl.u32 %v1432, 7
    %v1434 = vsub.s32 %v649, %v1433
    %v1435 = vrot.slane %v1206, %v1434
    %v1436 = vlaneseq
    %v1437 = vshrl.u32 %v1436, 7
    %v1438 = vsub.s32 %v649, %v1437
    %v1439 = vrot.slane %v1211, %v1438
    %v1440 = vlaneseq
    %v1441 = vshrl.u32 %v1440, 7
    %v1442 = vsub.s32 %v649, %v1441
    %v1443 = vrot.slane %v1216, %v1442
    %v1444 = vsel %vm714, %v1387, %v1383
    %v1445 = vsel %vm716, %v1391, %v1444
    %v1446 = vsel %vm718, %v1395, %v1445
    %v1447 = vsel %vm720, %v1399, %v1446
    %v1448 = vsel %vm722, %v1403, %v1447
    %v1449 = vsel %vm724, %v1407, %v1448
    %v1450 = vsel %vm726, %v1411, %v1449
    %v1451 = vsel %vm714, %v1419, %v1415
    %v1452 = vsel %vm716, %v1423, %v1451
    %v1453 = vsel %vm718, %v1427, %v1452
    %v1454 = vsel %vm720, %v1431, %v1453
    %v1455 = vsel %vm722, %v1435, %v1454
    %v1456 = vsel %vm724, %v1439, %v1455
    %v1457 = vsel %vm726, %v1443, %v1456
    %1460 = vst.msk [vmem:[%s7] sm:$0xff] %vm737, %v1450
    %1461 = vst.msk [vmem:[%s7 + $0x8] sm:$0xff] %vm737, %v1457
    // Predicated region
    $region30: #{tpu_custom_call.1} parent=1 // pred_check
      _
    $region31: #{tpu_custom_call.1} parent=1 // pred_check_branch
      %1463 = sbr.rel (0) target = $region33
    $region32: #{tpu_custom_call.1} parent=1 // pred_region
      %s1465 = ssub.s32 256, 256
      %1466 = vsyncadd [#allocation4], %s1465
      %s1467 = sshll.u32 [#allocation5], 4
      %s1468 = int_to_ptr.vmem [resolvable:$true] %s1467
      %1473 = dma.vmem_to_hbm [thread:$0]  %s1468, 256, %s6, [#allocation4], 128, 128, 8
    $region33: #{tpu_custom_call.1} parent=1 // pred_fallthru
      _
    // Predicated region
    $region34: #{tpu_custom_call.1} parent=1 // pred_check
      _
    $region35: #{tpu_custom_call.1} parent=1 // pred_check_branch
      %1475 = sbr.rel (0) target = $region37
    $region36: #{tpu_custom_call.1} parent=1 // pred_region
      _
    $region37: #{tpu_custom_call.1} parent=1 // pred_fallthru
      _
    // Predicated region
    $region38: #{tpu_custom_call.1} parent=1 // pred_check
      _
    $region39: #{tpu_custom_call.1} parent=1 // pred_check_branch
      %1477 = sbr.rel (0) target = $region41
    $region40: #{tpu_custom_call.1} parent=1 // pred_region
      %1478 = dma.done [#allocation4], 256
    $region41: #{tpu_custom_call.1} parent=1 // pred_fallthru
      _
    // Predicated region
    $region42: #{tpu_custom_call.1} parent=1 // pred_check
      _
    $region43: #{tpu_custom_call.1} parent=1 // pred_check_branch
      %1480 = sbr.rel (0) target = $region45
    $region44: #{tpu_custom_call.1} parent=1 // pred_region
      _
    $region45: #{tpu_custom_call.1} parent=1 // pred_fallthru
      _
    %1481 = vsyncpa [#allocation3], 1
    %1482 = vsyncpa [#allocation4], 1

</llo_original>
